<compile_context>
chip_gen: v5e
topology: v5e:2x2
jax: 0.10.0
libtpu: 0.0.40
codegen_flags: <defaults>
</compile_context>

<pallas_src>
import jax
import jax.numpy as jnp
import numpy as np
from jax.experimental import pallas as pl
from jax.experimental.pallas import tpu as pltpu


def _stride2_out(n: int) -> int:
    """Output length of a k-tap, pad=(k-1)//2, stride-2 conv/pool on length n."""
    return (n - 1) // 2 + 1


# ------------------------------ in-kernel helpers ---------------------------
def _pad_w(v, p, value):
    c, h, _ = v.shape
    z = jnp.full((c, h, p), value, jnp.float32)
    return jnp.concatenate([z, v, z], axis=2)


def _pad_h(v, p, value):
    c, _, w = v.shape
    z = jnp.full((c, p, w), value, jnp.float32)
    return jnp.concatenate([z, v, z], axis=1)


def _win_w(v, k, pad_value, op):
    """'same'-size k-tap sliding-window reduction along W (lane axis)."""
    c, h, w = v.shape
    vp = _pad_w(v, (k - 1) // 2, pad_value)
    acc = vp[:, :, 0:w]
    for d in range(1, k):
        acc = op(acc, vp[:, :, d:d + w])
    return acc


def _win_h(v, k, pad_value, op):
    """'same'-size k-tap sliding-window reduction along H (sublane axis)."""
    c, h, w = v.shape
    vp = _pad_h(v, (k - 1) // 2, pad_value)
    acc = vp[:, 0:h, :]
    for d in range(1, k):
        acc = op(acc, vp[:, d:d + h, :])
    return acc


def _down2(v):
    """Keep rows/cols 0,2,4,... (stride-2 subsample of a 'same'-size result)."""
    c, h, w = v.shape
    ho, wo = _stride2_out(h), _stride2_out(w)
    v = jnp.concatenate([v[:, 2 * i:2 * i + 1, :] for i in range(ho)], axis=1)
    v = jnp.concatenate([v[:, :, 2 * j:2 * j + 1] for j in range(wo)], axis=2)
    return v


def _avg_conv(v, k, stride):
    """k x k all-ones / k^2 conv, padding (k-1)//2, stride 1 or 2 (separable)."""
    v = _win_w(v, k, 0.0, jnp.add)
    v = _win_h(v, k, 0.0, jnp.add)
    if stride == 2:
        v = _down2(v)
    return v * (1.0 / float(k * k))


def _maxpool3_s2(v):
    """3x3 max pool, stride 2, padding 1 (separable max, -inf padding)."""
    v = _win_w(v, 3, -jnp.inf, jnp.maximum)
    v = _win_h(v, 3, -jnp.inf, jnp.maximum)
    return _down2(v)


def _colornet_kernel(x_ref, conv3_ref, conv4_ref):
    v = x_ref[...]                 # (1, H, W) f32 — whole image stays on-core
    v = _avg_conv(v, 7, 2)         # 7x7 ones/49, stride 2, pad 3
    v = _maxpool3_s2(v)            # 3x3 max pool, stride 2, pad 1
    for _ in range(6):             # six 3x3 ones/9, stride 1
        v = _avg_conv(v, 3, 1)
    v = _avg_conv(v, 3, 2)         # 3x3, stride 2
    for _ in range(7):             # seven 3x3, stride 1 -> conv_3
        v = _avg_conv(v, 3, 1)
    conv3_ref[...] = v
    v = _avg_conv(v, 3, 2)         # 3x3, stride 2
    for _ in range(11):            # eleven 3x3, stride 1 -> conv_4
        v = _avg_conv(v, 3, 1)
    conv4_ref[...] = v


# ---------------------------------- wrapper ---------------------------------
@jax.jit
def colornet_rgb_forward(x):
    """ColorNetRGB.forward: x (B, 3, H, W) -> (conv3, conv4), both NCHW."""
    B, C, H, W = x.shape
    N = B * C
    xm = x.astype(jnp.float32).reshape(N, H, W)

    h1, w1 = _stride2_out(H), _stride2_out(W)      # after 7x7 s2
    h2, w2 = _stride2_out(h1), _stride2_out(w1)    # after maxpool s2
    h3, w3 = _stride2_out(h2), _stride2_out(w2)    # after 1st 3x3 s2 -> conv_3
    h4, w4 = _stride2_out(h3), _stride2_out(w3)    # after 2nd 3x3 s2 -> conv_4

    conv3, conv4 = pl.pallas_call(
        _colornet_kernel,
        out_shape=(jax.ShapeDtypeStruct((N, h3, w3), jnp.float32),
                   jax.ShapeDtypeStruct((N, h4, w4), jnp.float32)),
        grid=(N,),
        in_specs=[pl.BlockSpec((1, H, W), lambda n: (n, 0, 0))],
        out_specs=(pl.BlockSpec((1, h3, w3), lambda n: (n, 0, 0)),
                   pl.BlockSpec((1, h4, w4), lambda n: (n, 0, 0))),
        compiler_params=pltpu.CompilerParams(
            dimension_semantics=("parallel",)),
    )(xm)
    return conv3.reshape(B, C, h3, w3), conv4.reshape(B, C, h4, w4)


# ---------------- pure-JAX reference (for correctness check) ----------------
def _reference_forward(x):
    f1 = jnp.ones((1, 1, 7, 7), jnp.float32) / 49.0
    f2 = jnp.ones((1, 1, 3, 3), jnp.float32) / 9.0

    def conv(v, f, s, p):
        return jax.lax.conv_general_dilated(
            v, f, (s, s), [(p, p), (p, p)],
            dimension_numbers=('NCHW', 'OIHW', 'NCHW'),
            precision=jax.lax.Precision.HIGHEST)

    def maxpool(v):
        return jax.lax.reduce_window(
            v, -jnp.inf, jax.lax.max, (1, 1, 3, 3), (1, 1, 2, 2),
            [(0, 0), (0, 0), (1, 1), (1, 1)])

    def colornet(v):
        v = conv(v, f1, 2, 3)
        v = maxpool(v)
        for _ in range(6):
            v = conv(v, f2, 1, 1)
        v = conv(v, f2, 2, 1)
        for _ in range(7):
            v = conv(v, f2, 1, 1)
        c3 = v
        v = conv(c3, f2, 2, 1)
        for _ in range(11):
            v = conv(v, f2, 1, 1)
        return c3, v

    c3s, c4s = [], []
    for c in range(3):
        c3, c4 = colornet(x[:, c:c + 1])
        c3s.append(c3)
        c4s.append(c4)
    return jnp.concatenate(c3s, axis=1), jnp.concatenate(c4s, axis=1)


if __name__ == "__main__":
    key = jax.random.PRNGKey(0)
    x = jax.random.normal(key, (2, 3, 32, 32), dtype=jnp.float32)

    conv3, conv4 = colornet_rgb_forward(x)
    jax.block_until_ready((conv3, conv4))

    r3, r4 = _reference_forward(x)
    assert conv3.shape == r3.shape and conv4.shape == r4.shape, (
        conv3.shape, r3.shape, conv4.shape, r4.shape)
    np.testing.assert_allclose(np.asarray(conv3), np.asarray(r3), rtol=1e-4, atol=1e-5)
    np.testing.assert_allclose(np.asarray(conv4), np.asarray(r4), rtol=1e-4, atol=1e-5)

    print("KERNEL_OK")
</pallas_src>

<mosaic_0001>
module attributes {stable_mosaic.version = 11 : i64} {
  func.func @_colornet_kernel(%arg0: i32, %arg1: memref<1x32x32xf32, #tpu.memory_space<vmem>>, %arg2: memref<1x4x4xf32, #tpu.memory_space<vmem>>, %arg3: memref<1x2x2xf32, #tpu.memory_space<vmem>>) attributes {dimension_semantics = [#tpu.dimension_semantics<parallel>], iteration_bounds = array<i64: 6>, scalar_prefetch = 0 : i64, scratch_operands = 0 : i64, tpu.core_type = #tpu.core_type<tc>, window_params = [{transform_indices = @transform_0, window_bounds = array<i64: 1, 32, 32>}, {transform_indices = @transform_1, window_bounds = array<i64: 1, 4, 4>}, {transform_indices = @transform_2, window_bounds = array<i64: 1, 2, 2>}]} {
    %c0 = arith.constant 0 : index
    %c0_0 = arith.constant 0 : index
    %c0_1 = arith.constant 0 : index
    %0 = vector.load %arg1[%c0, %c0_0, %c0_1] : memref<1x32x32xf32, #tpu.memory_space<vmem>>, vector<1x32x32xf32>
    %cst = arith.constant 0.000000e+00 : f32
    %1 = vector.broadcast %cst : f32 to vector<1x32x3xf32>
    %2 = tpu.concatenate %1, %0, %1 in 2 : vector<1x32x3xf32>, vector<1x32x32xf32>, vector<1x32x3xf32> -> vector<1x32x38xf32>
    %3 = vector.extract_strided_slice %2 {offsets = [0, 0, 0], sizes = [1, 32, 32], strides = [1, 1, 1]} : vector<1x32x38xf32> to vector<1x32x32xf32>
    %4 = vector.extract_strided_slice %2 {offsets = [0, 0, 1], sizes = [1, 32, 32], strides = [1, 1, 1]} : vector<1x32x38xf32> to vector<1x32x32xf32>
    %5 = arith.addf %3, %4 : vector<1x32x32xf32>
    %6 = vector.extract_strided_slice %2 {offsets = [0, 0, 2], sizes = [1, 32, 32], strides = [1, 1, 1]} : vector<1x32x38xf32> to vector<1x32x32xf32>
    %7 = arith.addf %5, %6 : vector<1x32x32xf32>
    %8 = vector.extract_strided_slice %2 {offsets = [0, 0, 3], sizes = [1, 32, 32], strides = [1, 1, 1]} : vector<1x32x38xf32> to vector<1x32x32xf32>
    %9 = arith.addf %7, %8 : vector<1x32x32xf32>
    %10 = vector.extract_strided_slice %2 {offsets = [0, 0, 4], sizes = [1, 32, 32], strides = [1, 1, 1]} : vector<1x32x38xf32> to vector<1x32x32xf32>
    %11 = arith.addf %9, %10 : vector<1x32x32xf32>
    %12 = vector.extract_strided_slice %2 {offsets = [0, 0, 5], sizes = [1, 32, 32], strides = [1, 1, 1]} : vector<1x32x38xf32> to vector<1x32x32xf32>
    %13 = arith.addf %11, %12 : vector<1x32x32xf32>
    %14 = vector.extract_strided_slice %2 {offsets = [0, 0, 6], sizes = [1, 32, 32], strides = [1, 1, 1]} : vector<1x32x38xf32> to vector<1x32x32xf32>
    %15 = arith.addf %13, %14 : vector<1x32x32xf32>
    %cst_2 = arith.constant 0.000000e+00 : f32
    %16 = vector.broadcast %cst_2 : f32 to vector<1x3x32xf32>
    %17 = tpu.concatenate %16, %15, %16 in 1 : vector<1x3x32xf32>, vector<1x32x32xf32>, vector<1x3x32xf32> -> vector<1x38x32xf32>
    %18 = vector.extract_strided_slice %17 {offsets = [0, 0, 0], sizes = [1, 32, 32], strides = [1, 1, 1]} : vector<1x38x32xf32> to vector<1x32x32xf32>
    %19 = vector.extract_strided_slice %17 {offsets = [0, 1, 0], sizes = [1, 32, 32], strides = [1, 1, 1]} : vector<1x38x32xf32> to vector<1x32x32xf32>
    %20 = arith.addf %18, %19 : vector<1x32x32xf32>
    %21 = vector.extract_strided_slice %17 {offsets = [0, 2, 0], sizes = [1, 32, 32], strides = [1, 1, 1]} : vector<1x38x32xf32> to vector<1x32x32xf32>
    %22 = arith.addf %20, %21 : vector<1x32x32xf32>
    %23 = vector.extract_strided_slice %17 {offsets = [0, 3, 0], sizes = [1, 32, 32], strides = [1, 1, 1]} : vector<1x38x32xf32> to vector<1x32x32xf32>
    %24 = arith.addf %22, %23 : vector<1x32x32xf32>
    %25 = vector.extract_strided_slice %17 {offsets = [0, 4, 0], sizes = [1, 32, 32], strides = [1, 1, 1]} : vector<1x38x32xf32> to vector<1x32x32xf32>
    %26 = arith.addf %24, %25 : vector<1x32x32xf32>
    %27 = vector.extract_strided_slice %17 {offsets = [0, 5, 0], sizes = [1, 32, 32], strides = [1, 1, 1]} : vector<1x38x32xf32> to vector<1x32x32xf32>
    %28 = arith.addf %26, %27 : vector<1x32x32xf32>
    %29 = vector.extract_strided_slice %17 {offsets = [0, 6, 0], sizes = [1, 32, 32], strides = [1, 1, 1]} : vector<1x38x32xf32> to vector<1x32x32xf32>
    %30 = arith.addf %28, %29 : vector<1x32x32xf32>
    %31 = vector.extract_strided_slice %30 {offsets = [0, 0, 0], sizes = [1, 1, 32], strides = [1, 1, 1]} : vector<1x32x32xf32> to vector<1x1x32xf32>
    %32 = vector.extract_strided_slice %30 {offsets = [0, 2, 0], sizes = [1, 1, 32], strides = [1, 1, 1]} : vector<1x32x32xf32> to vector<1x1x32xf32>
    %33 = vector.extract_strided_slice %30 {offsets = [0, 4, 0], sizes = [1, 1, 32], strides = [1, 1, 1]} : vector<1x32x32xf32> to vector<1x1x32xf32>
    %34 = vector.extract_strided_slice %30 {offsets = [0, 6, 0], sizes = [1, 1, 32], strides = [1, 1, 1]} : vector<1x32x32xf32> to vector<1x1x32xf32>
    %35 = vector.extract_strided_slice %30 {offsets = [0, 8, 0], sizes = [1, 1, 32], strides = [1, 1, 1]} : vector<1x32x32xf32> to vector<1x1x32xf32>
    %36 = vector.extract_strided_slice %30 {offsets = [0, 10, 0], sizes = [1, 1, 32], strides = [1, 1, 1]} : vector<1x32x32xf32> to vector<1x1x32xf32>
    %37 = vector.extract_strided_slice %30 {offsets = [0, 12, 0], sizes = [1, 1, 32], strides = [1, 1, 1]} : vector<1x32x32xf32> to vector<1x1x32xf32>
    %38 = vector.extract_strided_slice %30 {offsets = [0, 14, 0], sizes = [1, 1, 32], strides = [1, 1, 1]} : vector<1x32x32xf32> to vector<1x1x32xf32>
    %39 = vector.extract_strided_slice %30 {offsets = [0, 16, 0], sizes = [1, 1, 32], strides = [1, 1, 1]} : vector<1x32x32xf32> to vector<1x1x32xf32>
    %40 = vector.extract_strided_slice %30 {offsets = [0, 18, 0], sizes = [1, 1, 32], strides = [1, 1, 1]} : vector<1x32x32xf32> to vector<1x1x32xf32>
    %41 = vector.extract_strided_slice %30 {offsets = [0, 20, 0], sizes = [1, 1, 32], strides = [1, 1, 1]} : vector<1x32x32xf32> to vector<1x1x32xf32>
    %42 = vector.extract_strided_slice %30 {offsets = [0, 22, 0], sizes = [1, 1, 32], strides = [1, 1, 1]} : vector<1x32x32xf32> to vector<1x1x32xf32>
    %43 = vector.extract_strided_slice %30 {offsets = [0, 24, 0], sizes = [1, 1, 32], strides = [1, 1, 1]} : vector<1x32x32xf32> to vector<1x1x32xf32>
    %44 = vector.extract_strided_slice %30 {offsets = [0, 26, 0], sizes = [1, 1, 32], strides = [1, 1, 1]} : vector<1x32x32xf32> to vector<1x1x32xf32>
    %45 = vector.extract_strided_slice %30 {offsets = [0, 28, 0], sizes = [1, 1, 32], strides = [1, 1, 1]} : vector<1x32x32xf32> to vector<1x1x32xf32>
    %46 = vector.extract_strided_slice %30 {offsets = [0, 30, 0], sizes = [1, 1, 32], strides = [1, 1, 1]} : vector<1x32x32xf32> to vector<1x1x32xf32>
    %47 = tpu.concatenate %31, %32, %33, %34, %35, %36, %37, %38, %39, %40, %41, %42, %43, %44, %45, %46 in 1 : vector<1x1x32xf32>, vector<1x1x32xf32>, vector<1x1x32xf32>, vector<1x1x32xf32>, vector<1x1x32xf32>, vector<1x1x32xf32>, vector<1x1x32xf32>, vector<1x1x32xf32>, vector<1x1x32xf32>, vector<1x1x32xf32>, vector<1x1x32xf32>, vector<1x1x32xf32>, vector<1x1x32xf32>, vector<1x1x32xf32>, vector<1x1x32xf32>, vector<1x1x32xf32> -> vector<1x16x32xf32>
    %48 = vector.extract_strided_slice %47 {offsets = [0, 0, 0], sizes = [1, 16, 1], strides = [1, 1, 1]} : vector<1x16x32xf32> to vector<1x16x1xf32>
    %49 = vector.extract_strided_slice %47 {offsets = [0, 0, 2], sizes = [1, 16, 1], strides = [1, 1, 1]} : vector<1x16x32xf32> to vector<1x16x1xf32>
    %50 = vector.extract_strided_slice %47 {offsets = [0, 0, 4], sizes = [1, 16, 1], strides = [1, 1, 1]} : vector<1x16x32xf32> to vector<1x16x1xf32>
    %51 = vector.extract_strided_slice %47 {offsets = [0, 0, 6], sizes = [1, 16, 1], strides = [1, 1, 1]} : vector<1x16x32xf32> to vector<1x16x1xf32>
    %52 = vector.extract_strided_slice %47 {offsets = [0, 0, 8], sizes = [1, 16, 1], strides = [1, 1, 1]} : vector<1x16x32xf32> to vector<1x16x1xf32>
    %53 = vector.extract_strided_slice %47 {offsets = [0, 0, 10], sizes = [1, 16, 1], strides = [1, 1, 1]} : vector<1x16x32xf32> to vector<1x16x1xf32>
    %54 = vector.extract_strided_slice %47 {offsets = [0, 0, 12], sizes = [1, 16, 1], strides = [1, 1, 1]} : vector<1x16x32xf32> to vector<1x16x1xf32>
    %55 = vector.extract_strided_slice %47 {offsets = [0, 0, 14], sizes = [1, 16, 1], strides = [1, 1, 1]} : vector<1x16x32xf32> to vector<1x16x1xf32>
    %56 = vector.extract_strided_slice %47 {offsets = [0, 0, 16], sizes = [1, 16, 1], strides = [1, 1, 1]} : vector<1x16x32xf32> to vector<1x16x1xf32>
    %57 = vector.extract_strided_slice %47 {offsets = [0, 0, 18], sizes = [1, 16, 1], strides = [1, 1, 1]} : vector<1x16x32xf32> to vector<1x16x1xf32>
    %58 = vector.extract_strided_slice %47 {offsets = [0, 0, 20], sizes = [1, 16, 1], strides = [1, 1, 1]} : vector<1x16x32xf32> to vector<1x16x1xf32>
    %59 = vector.extract_strided_slice %47 {offsets = [0, 0, 22], sizes = [1, 16, 1], strides = [1, 1, 1]} : vector<1x16x32xf32> to vector<1x16x1xf32>
    %60 = vector.extract_strided_slice %47 {offsets = [0, 0, 24], sizes = [1, 16, 1], strides = [1, 1, 1]} : vector<1x16x32xf32> to vector<1x16x1xf32>
    %61 = vector.extract_strided_slice %47 {offsets = [0, 0, 26], sizes = [1, 16, 1], strides = [1, 1, 1]} : vector<1x16x32xf32> to vector<1x16x1xf32>
    %62 = vector.extract_strided_slice %47 {offsets = [0, 0, 28], sizes = [1, 16, 1], strides = [1, 1, 1]} : vector<1x16x32xf32> to vector<1x16x1xf32>
    %63 = vector.extract_strided_slice %47 {offsets = [0, 0, 30], sizes = [1, 16, 1], strides = [1, 1, 1]} : vector<1x16x32xf32> to vector<1x16x1xf32>
    %64 = tpu.concatenate %48, %49, %50, %51, %52, %53, %54, %55, %56, %57, %58, %59, %60, %61, %62, %63 in 2 : vector<1x16x1xf32>, vector<1x16x1xf32>, vector<1x16x1xf32>, vector<1x16x1xf32>, vector<1x16x1xf32>, vector<1x16x1xf32>, vector<1x16x1xf32>, vector<1x16x1xf32>, vector<1x16x1xf32>, vector<1x16x1xf32>, vector<1x16x1xf32>, vector<1x16x1xf32>, vector<1x16x1xf32>, vector<1x16x1xf32>, vector<1x16x1xf32>, vector<1x16x1xf32> -> vector<1x16x16xf32>
    %cst_3 = arith.constant 0.0204081628 : f32
    %65 = vector.broadcast %cst_3 : f32 to vector<1x16x16xf32>
    %66 = arith.mulf %64, %65 : vector<1x16x16xf32>
    %cst_4 = arith.constant 0xFF800000 : f32
    %67 = vector.broadcast %cst_4 : f32 to vector<1x16x1xf32>
    %68 = tpu.concatenate %67, %66, %67 in 2 : vector<1x16x1xf32>, vector<1x16x16xf32>, vector<1x16x1xf32> -> vector<1x16x18xf32>
    %69 = vector.extract_strided_slice %68 {offsets = [0, 0, 0], sizes = [1, 16, 16], strides = [1, 1, 1]} : vector<1x16x18xf32> to vector<1x16x16xf32>
    %70 = vector.extract_strided_slice %68 {offsets = [0, 0, 1], sizes = [1, 16, 16], strides = [1, 1, 1]} : vector<1x16x18xf32> to vector<1x16x16xf32>
    %71 = arith.maximumf %69, %70 : vector<1x16x16xf32>
    %72 = vector.extract_strided_slice %68 {offsets = [0, 0, 2], sizes = [1, 16, 16], strides = [1, 1, 1]} : vector<1x16x18xf32> to vector<1x16x16xf32>
    %73 = arith.maximumf %71, %72 : vector<1x16x16xf32>
    %cst_5 = arith.constant 0xFF800000 : f32
    %74 = vector.broadcast %cst_5 : f32 to vector<1x1x16xf32>
    %75 = tpu.concatenate %74, %73, %74 in 1 : vector<1x1x16xf32>, vector<1x16x16xf32>, vector<1x1x16xf32> -> vector<1x18x16xf32>
    %76 = vector.extract_strided_slice %75 {offsets = [0, 0, 0], sizes = [1, 16, 16], strides = [1, 1, 1]} : vector<1x18x16xf32> to vector<1x16x16xf32>
    %77 = vector.extract_strided_slice %75 {offsets = [0, 1, 0], sizes = [1, 16, 16], strides = [1, 1, 1]} : vector<1x18x16xf32> to vector<1x16x16xf32>
    %78 = arith.maximumf %76, %77 : vector<1x16x16xf32>
    %79 = vector.extract_strided_slice %75 {offsets = [0, 2, 0], sizes = [1, 16, 16], strides = [1, 1, 1]} : vector<1x18x16xf32> to vector<1x16x16xf32>
    %80 = arith.maximumf %78, %79 : vector<1x16x16xf32>
    %81 = vector.extract_strided_slice %80 {offsets = [0, 0, 0], sizes = [1, 1, 16], strides = [1, 1, 1]} : vector<1x16x16xf32> to vector<1x1x16xf32>
    %82 = vector.extract_strided_slice %80 {offsets = [0, 2, 0], sizes = [1, 1, 16], strides = [1, 1, 1]} : vector<1x16x16xf32> to vector<1x1x16xf32>
    %83 = vector.extract_strided_slice %80 {offsets = [0, 4, 0], sizes = [1, 1, 16], strides = [1, 1, 1]} : vector<1x16x16xf32> to vector<1x1x16xf32>
    %84 = vector.extract_strided_slice %80 {offsets = [0, 6, 0], sizes = [1, 1, 16], strides = [1, 1, 1]} : vector<1x16x16xf32> to vector<1x1x16xf32>
    %85 = vector.extract_strided_slice %80 {offsets = [0, 8, 0], sizes = [1, 1, 16], strides = [1, 1, 1]} : vector<1x16x16xf32> to vector<1x1x16xf32>
    %86 = vector.extract_strided_slice %80 {offsets = [0, 10, 0], sizes = [1, 1, 16], strides = [1, 1, 1]} : vector<1x16x16xf32> to vector<1x1x16xf32>
    %87 = vector.extract_strided_slice %80 {offsets = [0, 12, 0], sizes = [1, 1, 16], strides = [1, 1, 1]} : vector<1x16x16xf32> to vector<1x1x16xf32>
    %88 = vector.extract_strided_slice %80 {offsets = [0, 14, 0], sizes = [1, 1, 16], strides = [1, 1, 1]} : vector<1x16x16xf32> to vector<1x1x16xf32>
    %89 = tpu.concatenate %81, %82, %83, %84, %85, %86, %87, %88 in 1 : vector<1x1x16xf32>, vector<1x1x16xf32>, vector<1x1x16xf32>, vector<1x1x16xf32>, vector<1x1x16xf32>, vector<1x1x16xf32>, vector<1x1x16xf32>, vector<1x1x16xf32> -> vector<1x8x16xf32>
    %90 = vector.extract_strided_slice %89 {offsets = [0, 0, 0], sizes = [1, 8, 1], strides = [1, 1, 1]} : vector<1x8x16xf32> to vector<1x8x1xf32>
    %91 = vector.extract_strided_slice %89 {offsets = [0, 0, 2], sizes = [1, 8, 1], strides = [1, 1, 1]} : vector<1x8x16xf32> to vector<1x8x1xf32>
    %92 = vector.extract_strided_slice %89 {offsets = [0, 0, 4], sizes = [1, 8, 1], strides = [1, 1, 1]} : vector<1x8x16xf32> to vector<1x8x1xf32>
    %93 = vector.extract_strided_slice %89 {offsets = [0, 0, 6], sizes = [1, 8, 1], strides = [1, 1, 1]} : vector<1x8x16xf32> to vector<1x8x1xf32>
    %94 = vector.extract_strided_slice %89 {offsets = [0, 0, 8], sizes = [1, 8, 1], strides = [1, 1, 1]} : vector<1x8x16xf32> to vector<1x8x1xf32>
    %95 = vector.extract_strided_slice %89 {offsets = [0, 0, 10], sizes = [1, 8, 1], strides = [1, 1, 1]} : vector<1x8x16xf32> to vector<1x8x1xf32>
    %96 = vector.extract_strided_slice %89 {offsets = [0, 0, 12], sizes = [1, 8, 1], strides = [1, 1, 1]} : vector<1x8x16xf32> to vector<1x8x1xf32>
    %97 = vector.extract_strided_slice %89 {offsets = [0, 0, 14], sizes = [1, 8, 1], strides = [1, 1, 1]} : vector<1x8x16xf32> to vector<1x8x1xf32>
    %98 = tpu.concatenate %90, %91, %92, %93, %94, %95, %96, %97 in 2 : vector<1x8x1xf32>, vector<1x8x1xf32>, vector<1x8x1xf32>, vector<1x8x1xf32>, vector<1x8x1xf32>, vector<1x8x1xf32>, vector<1x8x1xf32>, vector<1x8x1xf32> -> vector<1x8x8xf32>
    %cst_6 = arith.constant 0.000000e+00 : f32
    %99 = vector.broadcast %cst_6 : f32 to vector<1x8x1xf32>
    %100 = tpu.concatenate %99, %98, %99 in 2 : vector<1x8x1xf32>, vector<1x8x8xf32>, vector<1x8x1xf32> -> vector<1x8x10xf32>
    %101 = vector.extract_strided_slice %100 {offsets = [0, 0, 0], sizes = [1, 8, 8], strides = [1, 1, 1]} : vector<1x8x10xf32> to vector<1x8x8xf32>
    %102 = vector.extract_strided_slice %100 {offsets = [0, 0, 1], sizes = [1, 8, 8], strides = [1, 1, 1]} : vector<1x8x10xf32> to vector<1x8x8xf32>
    %103 = arith.addf %101, %102 : vector<1x8x8xf32>
    %104 = vector.extract_strided_slice %100 {offsets = [0, 0, 2], sizes = [1, 8, 8], strides = [1, 1, 1]} : vector<1x8x10xf32> to vector<1x8x8xf32>
    %105 = arith.addf %103, %104 : vector<1x8x8xf32>
    %cst_7 = arith.constant 0.000000e+00 : f32
    %106 = vector.broadcast %cst_7 : f32 to vector<1x1x8xf32>
    %107 = tpu.concatenate %106, %105, %106 in 1 : vector<1x1x8xf32>, vector<1x8x8xf32>, vector<1x1x8xf32> -> vector<1x10x8xf32>
    %108 = vector.extract_strided_slice %107 {offsets = [0, 0, 0], sizes = [1, 8, 8], strides = [1, 1, 1]} : vector<1x10x8xf32> to vector<1x8x8xf32>
    %109 = vector.extract_strided_slice %107 {offsets = [0, 1, 0], sizes = [1, 8, 8], strides = [1, 1, 1]} : vector<1x10x8xf32> to vector<1x8x8xf32>
    %110 = arith.addf %108, %109 : vector<1x8x8xf32>
    %111 = vector.extract_strided_slice %107 {offsets = [0, 2, 0], sizes = [1, 8, 8], strides = [1, 1, 1]} : vector<1x10x8xf32> to vector<1x8x8xf32>
    %112 = arith.addf %110, %111 : vector<1x8x8xf32>
    %cst_8 = arith.constant 0.111111112 : f32
    %113 = vector.broadcast %cst_8 : f32 to vector<1x8x8xf32>
    %114 = arith.mulf %112, %113 : vector<1x8x8xf32>
    %cst_9 = arith.constant 0.000000e+00 : f32
    %115 = vector.broadcast %cst_9 : f32 to vector<1x8x1xf32>
    %116 = tpu.concatenate %115, %114, %115 in 2 : vector<1x8x1xf32>, vector<1x8x8xf32>, vector<1x8x1xf32> -> vector<1x8x10xf32>
    %117 = vector.extract_strided_slice %116 {offsets = [0, 0, 0], sizes = [1, 8, 8], strides = [1, 1, 1]} : vector<1x8x10xf32> to vector<1x8x8xf32>
    %118 = vector.extract_strided_slice %116 {offsets = [0, 0, 1], sizes = [1, 8, 8], strides = [1, 1, 1]} : vector<1x8x10xf32> to vector<1x8x8xf32>
    %119 = arith.addf %117, %118 : vector<1x8x8xf32>
    %120 = vector.extract_strided_slice %116 {offsets = [0, 0, 2], sizes = [1, 8, 8], strides = [1, 1, 1]} : vector<1x8x10xf32> to vector<1x8x8xf32>
    %121 = arith.addf %119, %120 : vector<1x8x8xf32>
    %cst_10 = arith.constant 0.000000e+00 : f32
    %122 = vector.broadcast %cst_10 : f32 to vector<1x1x8xf32>
    %123 = tpu.concatenate %122, %121, %122 in 1 : vector<1x1x8xf32>, vector<1x8x8xf32>, vector<1x1x8xf32> -> vector<1x10x8xf32>
    %124 = vector.extract_strided_slice %123 {offsets = [0, 0, 0], sizes = [1, 8, 8], strides = [1, 1, 1]} : vector<1x10x8xf32> to vector<1x8x8xf32>
    %125 = vector.extract_strided_slice %123 {offsets = [0, 1, 0], sizes = [1, 8, 8], strides = [1, 1, 1]} : vector<1x10x8xf32> to vector<1x8x8xf32>
    %126 = arith.addf %124, %125 : vector<1x8x8xf32>
    %127 = vector.extract_strided_slice %123 {offsets = [0, 2, 0], sizes = [1, 8, 8], strides = [1, 1, 1]} : vector<1x10x8xf32> to vector<1x8x8xf32>
    %128 = arith.addf %126, %127 : vector<1x8x8xf32>
    %cst_11 = arith.constant 0.111111112 : f32
    %129 = vector.broadcast %cst_11 : f32 to vector<1x8x8xf32>
    %130 = arith.mulf %128, %129 : vector<1x8x8xf32>
    %cst_12 = arith.constant 0.000000e+00 : f32
    %131 = vector.broadcast %cst_12 : f32 to vector<1x8x1xf32>
    %132 = tpu.concatenate %131, %130, %131 in 2 : vector<1x8x1xf32>, vector<1x8x8xf32>, vector<1x8x1xf32> -> vector<1x8x10xf32>
    %133 = vector.extract_strided_slice %132 {offsets = [0, 0, 0], sizes = [1, 8, 8], strides = [1, 1, 1]} : vector<1x8x10xf32> to vector<1x8x8xf32>
    %134 = vector.extract_strided_slice %132 {offsets = [0, 0, 1], sizes = [1, 8, 8], strides = [1, 1, 1]} : vector<1x8x10xf32> to vector<1x8x8xf32>
    %135 = arith.addf %133, %134 : vector<1x8x8xf32>
    %136 = vector.extract_strided_slice %132 {offsets = [0, 0, 2], sizes = [1, 8, 8], strides = [1, 1, 1]} : vector<1x8x10xf32> to vector<1x8x8xf32>
    %137 = arith.addf %135, %136 : vector<1x8x8xf32>
    %cst_13 = arith.constant 0.000000e+00 : f32
    %138 = vector.broadcast %cst_13 : f32 to vector<1x1x8xf32>
    %139 = tpu.concatenate %138, %137, %138 in 1 : vector<1x1x8xf32>, vector<1x8x8xf32>, vector<1x1x8xf32> -> vector<1x10x8xf32>
    %140 = vector.extract_strided_slice %139 {offsets = [0, 0, 0], sizes = [1, 8, 8], strides = [1, 1, 1]} : vector<1x10x8xf32> to vector<1x8x8xf32>
    %141 = vector.extract_strided_slice %139 {offsets = [0, 1, 0], sizes = [1, 8, 8], strides = [1, 1, 1]} : vector<1x10x8xf32> to vector<1x8x8xf32>
    %142 = arith.addf %140, %141 : vector<1x8x8xf32>
    %143 = vector.extract_strided_slice %139 {offsets = [0, 2, 0], sizes = [1, 8, 8], strides = [1, 1, 1]} : vector<1x10x8xf32> to vector<1x8x8xf32>
    %144 = arith.addf %142, %143 : vector<1x8x8xf32>
    %cst_14 = arith.constant 0.111111112 : f32
    %145 = vector.broadcast %cst_14 : f32 to vector<1x8x8xf32>
    %146 = arith.mulf %144, %145 : vector<1x8x8xf32>
    %cst_15 = arith.constant 0.000000e+00 : f32
    %147 = vector.broadcast %cst_15 : f32 to vector<1x8x1xf32>
    %148 = tpu.concatenate %147, %146, %147 in 2 : vector<1x8x1xf32>, vector<1x8x8xf32>, vector<1x8x1xf32> -> vector<1x8x10xf32>
    %149 = vector.extract_strided_slice %148 {offsets = [0, 0, 0], sizes = [1, 8, 8], strides = [1, 1, 1]} : vector<1x8x10xf32> to vector<1x8x8xf32>
    %150 = vector.extract_strided_slice %148 {offsets = [0, 0, 1], sizes = [1, 8, 8], strides = [1, 1, 1]} : vector<1x8x10xf32> to vector<1x8x8xf32>
    %151 = arith.addf %149, %150 : vector<1x8x8xf32>
    %152 = vector.extract_strided_slice %148 {offsets = [0, 0, 2], sizes = [1, 8, 8], strides = [1, 1, 1]} : vector<1x8x10xf32> to vector<1x8x8xf32>
    %153 = arith.addf %151, %152 : vector<1x8x8xf32>
    %cst_16 = arith.constant 0.000000e+00 : f32
    %154 = vector.broadcast %cst_16 : f32 to vector<1x1x8xf32>
    %155 = tpu.concatenate %154, %153, %154 in 1 : vector<1x1x8xf32>, vector<1x8x8xf32>, vector<1x1x8xf32> -> vector<1x10x8xf32>
    %156 = vector.extract_strided_slice %155 {offsets = [0, 0, 0], sizes = [1, 8, 8], strides = [1, 1, 1]} : vector<1x10x8xf32> to vector<1x8x8xf32>
    %157 = vector.extract_strided_slice %155 {offsets = [0, 1, 0], sizes = [1, 8, 8], strides = [1, 1, 1]} : vector<1x10x8xf32> to vector<1x8x8xf32>
    %158 = arith.addf %156, %157 : vector<1x8x8xf32>
    %159 = vector.extract_strided_slice %155 {offsets = [0, 2, 0], sizes = [1, 8, 8], strides = [1, 1, 1]} : vector<1x10x8xf32> to vector<1x8x8xf32>
    %160 = arith.addf %158, %159 : vector<1x8x8xf32>
    %cst_17 = arith.constant 0.111111112 : f32
    %161 = vector.broadcast %cst_17 : f32 to vector<1x8x8xf32>
    %162 = arith.mulf %160, %161 : vector<1x8x8xf32>
    %cst_18 = arith.constant 0.000000e+00 : f32
    %163 = vector.broadcast %cst_18 : f32 to vector<1x8x1xf32>
    %164 = tpu.concatenate %163, %162, %163 in 2 : vector<1x8x1xf32>, vector<1x8x8xf32>, vector<1x8x1xf32> -> vector<1x8x10xf32>
    %165 = vector.extract_strided_slice %164 {offsets = [0, 0, 0], sizes = [1, 8, 8], strides = [1, 1, 1]} : vector<1x8x10xf32> to vector<1x8x8xf32>
    %166 = vector.extract_strided_slice %164 {offsets = [0, 0, 1], sizes = [1, 8, 8], strides = [1, 1, 1]} : vector<1x8x10xf32> to vector<1x8x8xf32>
    %167 = arith.addf %165, %166 : vector<1x8x8xf32>
    %168 = vector.extract_strided_slice %164 {offsets = [0, 0, 2], sizes = [1, 8, 8], strides = [1, 1, 1]} : vector<1x8x10xf32> to vector<1x8x8xf32>
    %169 = arith.addf %167, %168 : vector<1x8x8xf32>
    %cst_19 = arith.constant 0.000000e+00 : f32
    %170 = vector.broadcast %cst_19 : f32 to vector<1x1x8xf32>
    %171 = tpu.concatenate %170, %169, %170 in 1 : vector<1x1x8xf32>, vector<1x8x8xf32>, vector<1x1x8xf32> -> vector<1x10x8xf32>
    %172 = vector.extract_strided_slice %171 {offsets = [0, 0, 0], sizes = [1, 8, 8], strides = [1, 1, 1]} : vector<1x10x8xf32> to vector<1x8x8xf32>
    %173 = vector.extract_strided_slice %171 {offsets = [0, 1, 0], sizes = [1, 8, 8], strides = [1, 1, 1]} : vector<1x10x8xf32> to vector<1x8x8xf32>
    %174 = arith.addf %172, %173 : vector<1x8x8xf32>
    %175 = vector.extract_strided_slice %171 {offsets = [0, 2, 0], sizes = [1, 8, 8], strides = [1, 1, 1]} : vector<1x10x8xf32> to vector<1x8x8xf32>
    %176 = arith.addf %174, %175 : vector<1x8x8xf32>
    %cst_20 = arith.constant 0.111111112 : f32
    %177 = vector.broadcast %cst_20 : f32 to vector<1x8x8xf32>
    %178 = arith.mulf %176, %177 : vector<1x8x8xf32>
    %cst_21 = arith.constant 0.000000e+00 : f32
    %179 = vector.broadcast %cst_21 : f32 to vector<1x8x1xf32>
    %180 = tpu.concatenate %179, %178, %179 in 2 : vector<1x8x1xf32>, vector<1x8x8xf32>, vector<1x8x1xf32> -> vector<1x8x10xf32>
    %181 = vector.extract_strided_slice %180 {offsets = [0, 0, 0], sizes = [1, 8, 8], strides = [1, 1, 1]} : vector<1x8x10xf32> to vector<1x8x8xf32>
    %182 = vector.extract_strided_slice %180 {offsets = [0, 0, 1], sizes = [1, 8, 8], strides = [1, 1, 1]} : vector<1x8x10xf32> to vector<1x8x8xf32>
    %183 = arith.addf %181, %182 : vector<1x8x8xf32>
    %184 = vector.extract_strided_slice %180 {offsets = [0, 0, 2], sizes = [1, 8, 8], strides = [1, 1, 1]} : vector<1x8x10xf32> to vector<1x8x8xf32>
    %185 = arith.addf %183, %184 : vector<1x8x8xf32>
    %cst_22 = arith.constant 0.000000e+00 : f32
    %186 = vector.broadcast %cst_22 : f32 to vector<1x1x8xf32>
    %187 = tpu.concatenate %186, %185, %186 in 1 : vector<1x1x8xf32>, vector<1x8x8xf32>, vector<1x1x8xf32> -> vector<1x10x8xf32>
    %188 = vector.extract_strided_slice %187 {offsets = [0, 0, 0], sizes = [1, 8, 8], strides = [1, 1, 1]} : vector<1x10x8xf32> to vector<1x8x8xf32>
    %189 = vector.extract_strided_slice %187 {offsets = [0, 1, 0], sizes = [1, 8, 8], strides = [1, 1, 1]} : vector<1x10x8xf32> to vector<1x8x8xf32>
    %190 = arith.addf %188, %189 : vector<1x8x8xf32>
    %191 = vector.extract_strided_slice %187 {offsets = [0, 2, 0], sizes = [1, 8, 8], strides = [1, 1, 1]} : vector<1x10x8xf32> to vector<1x8x8xf32>
    %192 = arith.addf %190, %191 : vector<1x8x8xf32>
    %cst_23 = arith.constant 0.111111112 : f32
    %193 = vector.broadcast %cst_23 : f32 to vector<1x8x8xf32>
    %194 = arith.mulf %192, %193 : vector<1x8x8xf32>
    %cst_24 = arith.constant 0.000000e+00 : f32
    %195 = vector.broadcast %cst_24 : f32 to vector<1x8x1xf32>
    %196 = tpu.concatenate %195, %194, %195 in 2 : vector<1x8x1xf32>, vector<1x8x8xf32>, vector<1x8x1xf32> -> vector<1x8x10xf32>
    %197 = vector.extract_strided_slice %196 {offsets = [0, 0, 0], sizes = [1, 8, 8], strides = [1, 1, 1]} : vector<1x8x10xf32> to vector<1x8x8xf32>
    %198 = vector.extract_strided_slice %196 {offsets = [0, 0, 1], sizes = [1, 8, 8], strides = [1, 1, 1]} : vector<1x8x10xf32> to vector<1x8x8xf32>
    %199 = arith.addf %197, %198 : vector<1x8x8xf32>
    %200 = vector.extract_strided_slice %196 {offsets = [0, 0, 2], sizes = [1, 8, 8], strides = [1, 1, 1]} : vector<1x8x10xf32> to vector<1x8x8xf32>
    %201 = arith.addf %199, %200 : vector<1x8x8xf32>
    %cst_25 = arith.constant 0.000000e+00 : f32
    %202 = vector.broadcast %cst_25 : f32 to vector<1x1x8xf32>
    %203 = tpu.concatenate %202, %201, %202 in 1 : vector<1x1x8xf32>, vector<1x8x8xf32>, vector<1x1x8xf32> -> vector<1x10x8xf32>
    %204 = vector.extract_strided_slice %203 {offsets = [0, 0, 0], sizes = [1, 8, 8], strides = [1, 1, 1]} : vector<1x10x8xf32> to vector<1x8x8xf32>
    %205 = vector.extract_strided_slice %203 {offsets = [0, 1, 0], sizes = [1, 8, 8], strides = [1, 1, 1]} : vector<1x10x8xf32> to vector<1x8x8xf32>
    %206 = arith.addf %204, %205 : vector<1x8x8xf32>
    %207 = vector.extract_strided_slice %203 {offsets = [0, 2, 0], sizes = [1, 8, 8], strides = [1, 1, 1]} : vector<1x10x8xf32> to vector<1x8x8xf32>
    %208 = arith.addf %206, %207 : vector<1x8x8xf32>
    %209 = vector.extract_strided_slice %208 {offsets = [0, 0, 0], sizes = [1, 1, 8], strides = [1, 1, 1]} : vector<1x8x8xf32> to vector<1x1x8xf32>
    %210 = vector.extract_strided_slice %208 {offsets = [0, 2, 0], sizes = [1, 1, 8], strides = [1, 1, 1]} : vector<1x8x8xf32> to vector<1x1x8xf32>
    %211 = vector.extract_strided_slice %208 {offsets = [0, 4, 0], sizes = [1, 1, 8], strides = [1, 1, 1]} : vector<1x8x8xf32> to vector<1x1x8xf32>
    %212 = vector.extract_strided_slice %208 {offsets = [0, 6, 0], sizes = [1, 1, 8], strides = [1, 1, 1]} : vector<1x8x8xf32> to vector<1x1x8xf32>
    %213 = tpu.concatenate %209, %210, %211, %212 in 1 : vector<1x1x8xf32>, vector<1x1x8xf32>, vector<1x1x8xf32>, vector<1x1x8xf32> -> vector<1x4x8xf32>
    %214 = vector.extract_strided_slice %213 {offsets = [0, 0, 0], sizes = [1, 4, 1], strides = [1, 1, 1]} : vector<1x4x8xf32> to vector<1x4x1xf32>
    %215 = vector.extract_strided_slice %213 {offsets = [0, 0, 2], sizes = [1, 4, 1], strides = [1, 1, 1]} : vector<1x4x8xf32> to vector<1x4x1xf32>
    %216 = vector.extract_strided_slice %213 {offsets = [0, 0, 4], sizes = [1, 4, 1], strides = [1, 1, 1]} : vector<1x4x8xf32> to vector<1x4x1xf32>
    %217 = vector.extract_strided_slice %213 {offsets = [0, 0, 6], sizes = [1, 4, 1], strides = [1, 1, 1]} : vector<1x4x8xf32> to vector<1x4x1xf32>
    %218 = tpu.concatenate %214, %215, %216, %217 in 2 : vector<1x4x1xf32>, vector<1x4x1xf32>, vector<1x4x1xf32>, vector<1x4x1xf32> -> vector<1x4x4xf32>
    %cst_26 = arith.constant 0.111111112 : f32
    %219 = vector.broadcast %cst_26 : f32 to vector<1x4x4xf32>
    %220 = arith.mulf %218, %219 : vector<1x4x4xf32>
    %cst_27 = arith.constant 0.000000e+00 : f32
    %221 = vector.broadcast %cst_27 : f32 to vector<1x4x1xf32>
    %222 = tpu.concatenate %221, %220, %221 in 2 : vector<1x4x1xf32>, vector<1x4x4xf32>, vector<1x4x1xf32> -> vector<1x4x6xf32>
    %223 = vector.extract_strided_slice %222 {offsets = [0, 0, 0], sizes = [1, 4, 4], strides = [1, 1, 1]} : vector<1x4x6xf32> to vector<1x4x4xf32>
    %224 = vector.extract_strided_slice %222 {offsets = [0, 0, 1], sizes = [1, 4, 4], strides = [1, 1, 1]} : vector<1x4x6xf32> to vector<1x4x4xf32>
    %225 = arith.addf %223, %224 : vector<1x4x4xf32>
    %226 = vector.extract_strided_slice %222 {offsets = [0, 0, 2], sizes = [1, 4, 4], strides = [1, 1, 1]} : vector<1x4x6xf32> to vector<1x4x4xf32>
    %227 = arith.addf %225, %226 : vector<1x4x4xf32>
    %cst_28 = arith.constant 0.000000e+00 : f32
    %228 = vector.broadcast %cst_28 : f32 to vector<1x1x4xf32>
    %229 = tpu.concatenate %228, %227, %228 in 1 : vector<1x1x4xf32>, vector<1x4x4xf32>, vector<1x1x4xf32> -> vector<1x6x4xf32>
    %230 = vector.extract_strided_slice %229 {offsets = [0, 0, 0], sizes = [1, 4, 4], strides = [1, 1, 1]} : vector<1x6x4xf32> to vector<1x4x4xf32>
    %231 = vector.extract_strided_slice %229 {offsets = [0, 1, 0], sizes = [1, 4, 4], strides = [1, 1, 1]} : vector<1x6x4xf32> to vector<1x4x4xf32>
    %232 = arith.addf %230, %231 : vector<1x4x4xf32>
    %233 = vector.extract_strided_slice %229 {offsets = [0, 2, 0], sizes = [1, 4, 4], strides = [1, 1, 1]} : vector<1x6x4xf32> to vector<1x4x4xf32>
    %234 = arith.addf %232, %233 : vector<1x4x4xf32>
    %cst_29 = arith.constant 0.111111112 : f32
    %235 = vector.broadcast %cst_29 : f32 to vector<1x4x4xf32>
    %236 = arith.mulf %234, %235 : vector<1x4x4xf32>
    %cst_30 = arith.constant 0.000000e+00 : f32
    %237 = vector.broadcast %cst_30 : f32 to vector<1x4x1xf32>
    %238 = tpu.concatenate %237, %236, %237 in 2 : vector<1x4x1xf32>, vector<1x4x4xf32>, vector<1x4x1xf32> -> vector<1x4x6xf32>
    %239 = vector.extract_strided_slice %238 {offsets = [0, 0, 0], sizes = [1, 4, 4], strides = [1, 1, 1]} : vector<1x4x6xf32> to vector<1x4x4xf32>
    %240 = vector.extract_strided_slice %238 {offsets = [0, 0, 1], sizes = [1, 4, 4], strides = [1, 1, 1]} : vector<1x4x6xf32> to vector<1x4x4xf32>
    %241 = arith.addf %239, %240 : vector<1x4x4xf32>
    %242 = vector.extract_strided_slice %238 {offsets = [0, 0, 2], sizes = [1, 4, 4], strides = [1, 1, 1]} : vector<1x4x6xf32> to vector<1x4x4xf32>
    %243 = arith.addf %241, %242 : vector<1x4x4xf32>
    %cst_31 = arith.constant 0.000000e+00 : f32
    %244 = vector.broadcast %cst_31 : f32 to vector<1x1x4xf32>
    %245 = tpu.concatenate %244, %243, %244 in 1 : vector<1x1x4xf32>, vector<1x4x4xf32>, vector<1x1x4xf32> -> vector<1x6x4xf32>
    %246 = vector.extract_strided_slice %245 {offsets = [0, 0, 0], sizes = [1, 4, 4], strides = [1, 1, 1]} : vector<1x6x4xf32> to vector<1x4x4xf32>
    %247 = vector.extract_strided_slice %245 {offsets = [0, 1, 0], sizes = [1, 4, 4], strides = [1, 1, 1]} : vector<1x6x4xf32> to vector<1x4x4xf32>
    %248 = arith.addf %246, %247 : vector<1x4x4xf32>
    %249 = vector.extract_strided_slice %245 {offsets = [0, 2, 0], sizes = [1, 4, 4], strides = [1, 1, 1]} : vector<1x6x4xf32> to vector<1x4x4xf32>
    %250 = arith.addf %248, %249 : vector<1x4x4xf32>
    %cst_32 = arith.constant 0.111111112 : f32
    %251 = vector.broadcast %cst_32 : f32 to vector<1x4x4xf32>
    %252 = arith.mulf %250, %251 : vector<1x4x4xf32>
    %cst_33 = arith.constant 0.000000e+00 : f32
    %253 = vector.broadcast %cst_33 : f32 to vector<1x4x1xf32>
    %254 = tpu.concatenate %253, %252, %253 in 2 : vector<1x4x1xf32>, vector<1x4x4xf32>, vector<1x4x1xf32> -> vector<1x4x6xf32>
    %255 = vector.extract_strided_slice %254 {offsets = [0, 0, 0], sizes = [1, 4, 4], strides = [1, 1, 1]} : vector<1x4x6xf32> to vector<1x4x4xf32>
    %256 = vector.extract_strided_slice %254 {offsets = [0, 0, 1], sizes = [1, 4, 4], strides = [1, 1, 1]} : vector<1x4x6xf32> to vector<1x4x4xf32>
    %257 = arith.addf %255, %256 : vector<1x4x4xf32>
    %258 = vector.extract_strided_slice %254 {offsets = [0, 0, 2], sizes = [1, 4, 4], strides = [1, 1, 1]} : vector<1x4x6xf32> to vector<1x4x4xf32>
    %259 = arith.addf %257, %258 : vector<1x4x4xf32>
    %cst_34 = arith.constant 0.000000e+00 : f32
    %260 = vector.broadcast %cst_34 : f32 to vector<1x1x4xf32>
    %261 = tpu.concatenate %260, %259, %260 in 1 : vector<1x1x4xf32>, vector<1x4x4xf32>, vector<1x1x4xf32> -> vector<1x6x4xf32>
    %262 = vector.extract_strided_slice %261 {offsets = [0, 0, 0], sizes = [1, 4, 4], strides = [1, 1, 1]} : vector<1x6x4xf32> to vector<1x4x4xf32>
    %263 = vector.extract_strided_slice %261 {offsets = [0, 1, 0], sizes = [1, 4, 4], strides = [1, 1, 1]} : vector<1x6x4xf32> to vector<1x4x4xf32>
    %264 = arith.addf %262, %263 : vector<1x4x4xf32>
    %265 = vector.extract_strided_slice %261 {offsets = [0, 2, 0], sizes = [1, 4, 4], strides = [1, 1, 1]} : vector<1x6x4xf32> to vector<1x4x4xf32>
    %266 = arith.addf %264, %265 : vector<1x4x4xf32>
    %cst_35 = arith.constant 0.111111112 : f32
    %267 = vector.broadcast %cst_35 : f32 to vector<1x4x4xf32>
    %268 = arith.mulf %266, %267 : vector<1x4x4xf32>
    %cst_36 = arith.constant 0.000000e+00 : f32
    %269 = vector.broadcast %cst_36 : f32 to vector<1x4x1xf32>
    %270 = tpu.concatenate %269, %268, %269 in 2 : vector<1x4x1xf32>, vector<1x4x4xf32>, vector<1x4x1xf32> -> vector<1x4x6xf32>
    %271 = vector.extract_strided_slice %270 {offsets = [0, 0, 0], sizes = [1, 4, 4], strides = [1, 1, 1]} : vector<1x4x6xf32> to vector<1x4x4xf32>
    %272 = vector.extract_strided_slice %270 {offsets = [0, 0, 1], sizes = [1, 4, 4], strides = [1, 1, 1]} : vector<1x4x6xf32> to vector<1x4x4xf32>
    %273 = arith.addf %271, %272 : vector<1x4x4xf32>
    %274 = vector.extract_strided_slice %270 {offsets = [0, 0, 2], sizes = [1, 4, 4], strides = [1, 1, 1]} : vector<1x4x6xf32> to vector<1x4x4xf32>
    %275 = arith.addf %273, %274 : vector<1x4x4xf32>
    %cst_37 = arith.constant 0.000000e+00 : f32
    %276 = vector.broadcast %cst_37 : f32 to vector<1x1x4xf32>
    %277 = tpu.concatenate %276, %275, %276 in 1 : vector<1x1x4xf32>, vector<1x4x4xf32>, vector<1x1x4xf32> -> vector<1x6x4xf32>
    %278 = vector.extract_strided_slice %277 {offsets = [0, 0, 0], sizes = [1, 4, 4], strides = [1, 1, 1]} : vector<1x6x4xf32> to vector<1x4x4xf32>
    %279 = vector.extract_strided_slice %277 {offsets = [0, 1, 0], sizes = [1, 4, 4], strides = [1, 1, 1]} : vector<1x6x4xf32> to vector<1x4x4xf32>
    %280 = arith.addf %278, %279 : vector<1x4x4xf32>
    %281 = vector.extract_strided_slice %277 {offsets = [0, 2, 0], sizes = [1, 4, 4], strides = [1, 1, 1]} : vector<1x6x4xf32> to vector<1x4x4xf32>
    %282 = arith.addf %280, %281 : vector<1x4x4xf32>
    %cst_38 = arith.constant 0.111111112 : f32
    %283 = vector.broadcast %cst_38 : f32 to vector<1x4x4xf32>
    %284 = arith.mulf %282, %283 : vector<1x4x4xf32>
    %cst_39 = arith.constant 0.000000e+00 : f32
    %285 = vector.broadcast %cst_39 : f32 to vector<1x4x1xf32>
    %286 = tpu.concatenate %285, %284, %285 in 2 : vector<1x4x1xf32>, vector<1x4x4xf32>, vector<1x4x1xf32> -> vector<1x4x6xf32>
    %287 = vector.extract_strided_slice %286 {offsets = [0, 0, 0], sizes = [1, 4, 4], strides = [1, 1, 1]} : vector<1x4x6xf32> to vector<1x4x4xf32>
    %288 = vector.extract_strided_slice %286 {offsets = [0, 0, 1], sizes = [1, 4, 4], strides = [1, 1, 1]} : vector<1x4x6xf32> to vector<1x4x4xf32>
    %289 = arith.addf %287, %288 : vector<1x4x4xf32>
    %290 = vector.extract_strided_slice %286 {offsets = [0, 0, 2], sizes = [1, 4, 4], strides = [1, 1, 1]} : vector<1x4x6xf32> to vector<1x4x4xf32>
    %291 = arith.addf %289, %290 : vector<1x4x4xf32>
    %cst_40 = arith.constant 0.000000e+00 : f32
    %292 = vector.broadcast %cst_40 : f32 to vector<1x1x4xf32>
    %293 = tpu.concatenate %292, %291, %292 in 1 : vector<1x1x4xf32>, vector<1x4x4xf32>, vector<1x1x4xf32> -> vector<1x6x4xf32>
    %294 = vector.extract_strided_slice %293 {offsets = [0, 0, 0], sizes = [1, 4, 4], strides = [1, 1, 1]} : vector<1x6x4xf32> to vector<1x4x4xf32>
    %295 = vector.extract_strided_slice %293 {offsets = [0, 1, 0], sizes = [1, 4, 4], strides = [1, 1, 1]} : vector<1x6x4xf32> to vector<1x4x4xf32>
    %296 = arith.addf %294, %295 : vector<1x4x4xf32>
    %297 = vector.extract_strided_slice %293 {offsets = [0, 2, 0], sizes = [1, 4, 4], strides = [1, 1, 1]} : vector<1x6x4xf32> to vector<1x4x4xf32>
    %298 = arith.addf %296, %297 : vector<1x4x4xf32>
    %cst_41 = arith.constant 0.111111112 : f32
    %299 = vector.broadcast %cst_41 : f32 to vector<1x4x4xf32>
    %300 = arith.mulf %298, %299 : vector<1x4x4xf32>
    %cst_42 = arith.constant 0.000000e+00 : f32
    %301 = vector.broadcast %cst_42 : f32 to vector<1x4x1xf32>
    %302 = tpu.concatenate %301, %300, %301 in 2 : vector<1x4x1xf32>, vector<1x4x4xf32>, vector<1x4x1xf32> -> vector<1x4x6xf32>
    %303 = vector.extract_strided_slice %302 {offsets = [0, 0, 0], sizes = [1, 4, 4], strides = [1, 1, 1]} : vector<1x4x6xf32> to vector<1x4x4xf32>
    %304 = vector.extract_strided_slice %302 {offsets = [0, 0, 1], sizes = [1, 4, 4], strides = [1, 1, 1]} : vector<1x4x6xf32> to vector<1x4x4xf32>
    %305 = arith.addf %303, %304 : vector<1x4x4xf32>
    %306 = vector.extract_strided_slice %302 {offsets = [0, 0, 2], sizes = [1, 4, 4], strides = [1, 1, 1]} : vector<1x4x6xf32> to vector<1x4x4xf32>
    %307 = arith.addf %305, %306 : vector<1x4x4xf32>
    %cst_43 = arith.constant 0.000000e+00 : f32
    %308 = vector.broadcast %cst_43 : f32 to vector<1x1x4xf32>
    %309 = tpu.concatenate %308, %307, %308 in 1 : vector<1x1x4xf32>, vector<1x4x4xf32>, vector<1x1x4xf32> -> vector<1x6x4xf32>
    %310 = vector.extract_strided_slice %309 {offsets = [0, 0, 0], sizes = [1, 4, 4], strides = [1, 1, 1]} : vector<1x6x4xf32> to vector<1x4x4xf32>
    %311 = vector.extract_strided_slice %309 {offsets = [0, 1, 0], sizes = [1, 4, 4], strides = [1, 1, 1]} : vector<1x6x4xf32> to vector<1x4x4xf32>
    %312 = arith.addf %310, %311 : vector<1x4x4xf32>
    %313 = vector.extract_strided_slice %309 {offsets = [0, 2, 0], sizes = [1, 4, 4], strides = [1, 1, 1]} : vector<1x6x4xf32> to vector<1x4x4xf32>
    %314 = arith.addf %312, %313 : vector<1x4x4xf32>
    %cst_44 = arith.constant 0.111111112 : f32
    %315 = vector.broadcast %cst_44 : f32 to vector<1x4x4xf32>
    %316 = arith.mulf %314, %315 : vector<1x4x4xf32>
    %cst_45 = arith.constant 0.000000e+00 : f32
    %317 = vector.broadcast %cst_45 : f32 to vector<1x4x1xf32>
    %318 = tpu.concatenate %317, %316, %317 in 2 : vector<1x4x1xf32>, vector<1x4x4xf32>, vector<1x4x1xf32> -> vector<1x4x6xf32>
    %319 = vector.extract_strided_slice %318 {offsets = [0, 0, 0], sizes = [1, 4, 4], strides = [1, 1, 1]} : vector<1x4x6xf32> to vector<1x4x4xf32>
    %320 = vector.extract_strided_slice %318 {offsets = [0, 0, 1], sizes = [1, 4, 4], strides = [1, 1, 1]} : vector<1x4x6xf32> to vector<1x4x4xf32>
    %321 = arith.addf %319, %320 : vector<1x4x4xf32>
    %322 = vector.extract_strided_slice %318 {offsets = [0, 0, 2], sizes = [1, 4, 4], strides = [1, 1, 1]} : vector<1x4x6xf32> to vector<1x4x4xf32>
    %323 = arith.addf %321, %322 : vector<1x4x4xf32>
    %cst_46 = arith.constant 0.000000e+00 : f32
    %324 = vector.broadcast %cst_46 : f32 to vector<1x1x4xf32>
    %325 = tpu.concatenate %324, %323, %324 in 1 : vector<1x1x4xf32>, vector<1x4x4xf32>, vector<1x1x4xf32> -> vector<1x6x4xf32>
    %326 = vector.extract_strided_slice %325 {offsets = [0, 0, 0], sizes = [1, 4, 4], strides = [1, 1, 1]} : vector<1x6x4xf32> to vector<1x4x4xf32>
    %327 = vector.extract_strided_slice %325 {offsets = [0, 1, 0], sizes = [1, 4, 4], strides = [1, 1, 1]} : vector<1x6x4xf32> to vector<1x4x4xf32>
    %328 = arith.addf %326, %327 : vector<1x4x4xf32>
    %329 = vector.extract_strided_slice %325 {offsets = [0, 2, 0], sizes = [1, 4, 4], strides = [1, 1, 1]} : vector<1x6x4xf32> to vector<1x4x4xf32>
    %330 = arith.addf %328, %329 : vector<1x4x4xf32>
    %cst_47 = arith.constant 0.111111112 : f32
    %331 = vector.broadcast %cst_47 : f32 to vector<1x4x4xf32>
    %332 = arith.mulf %330, %331 : vector<1x4x4xf32>
    %c0_48 = arith.constant 0 : index
    %c0_49 = arith.constant 0 : index
    %c0_50 = arith.constant 0 : index
    %333 = vector.load %arg2[%c0_48, %c0_49, %c0_50] : memref<1x4x4xf32, #tpu.memory_space<vmem>>, vector<1x4x4xf32>
    tpu.vector_store %arg2[%c0_48, %c0_49, %c0_50], %332 {strides = array<i32>} : memref<1x4x4xf32, #tpu.memory_space<vmem>>, vector<1x4x4xf32>,
    %cst_51 = arith.constant 0.000000e+00 : f32
    %334 = vector.broadcast %cst_51 : f32 to vector<1x4x1xf32>
    %335 = tpu.concatenate %334, %332, %334 in 2 : vector<1x4x1xf32>, vector<1x4x4xf32>, vector<1x4x1xf32> -> vector<1x4x6xf32>
    %336 = vector.extract_strided_slice %335 {offsets = [0, 0, 0], sizes = [1, 4, 4], strides = [1, 1, 1]} : vector<1x4x6xf32> to vector<1x4x4xf32>
    %337 = vector.extract_strided_slice %335 {offsets = [0, 0, 1], sizes = [1, 4, 4], strides = [1, 1, 1]} : vector<1x4x6xf32> to vector<1x4x4xf32>
    %338 = arith.addf %336, %337 : vector<1x4x4xf32>
    %339 = vector.extract_strided_slice %335 {offsets = [0, 0, 2], sizes = [1, 4, 4], strides = [1, 1, 1]} : vector<1x4x6xf32> to vector<1x4x4xf32>
    %340 = arith.addf %338, %339 : vector<1x4x4xf32>
    %cst_52 = arith.constant 0.000000e+00 : f32
    %341 = vector.broadcast %cst_52 : f32 to vector<1x1x4xf32>
    %342 = tpu.concatenate %341, %340, %341 in 1 : vector<1x1x4xf32>, vector<1x4x4xf32>, vector<1x1x4xf32> -> vector<1x6x4xf32>
    %343 = vector.extract_strided_slice %342 {offsets = [0, 0, 0], sizes = [1, 4, 4], strides = [1, 1, 1]} : vector<1x6x4xf32> to vector<1x4x4xf32>
    %344 = vector.extract_strided_slice %342 {offsets = [0, 1, 0], sizes = [1, 4, 4], strides = [1, 1, 1]} : vector<1x6x4xf32> to vector<1x4x4xf32>
    %345 = arith.addf %343, %344 : vector<1x4x4xf32>
    %346 = vector.extract_strided_slice %342 {offsets = [0, 2, 0], sizes = [1, 4, 4], strides = [1, 1, 1]} : vector<1x6x4xf32> to vector<1x4x4xf32>
    %347 = arith.addf %345, %346 : vector<1x4x4xf32>
    %348 = vector.extract_strided_slice %347 {offsets = [0, 0, 0], sizes = [1, 1, 4], strides = [1, 1, 1]} : vector<1x4x4xf32> to vector<1x1x4xf32>
    %349 = vector.extract_strided_slice %347 {offsets = [0, 2, 0], sizes = [1, 1, 4], strides = [1, 1, 1]} : vector<1x4x4xf32> to vector<1x1x4xf32>
    %350 = tpu.concatenate %348, %349 in 1 : vector<1x1x4xf32>, vector<1x1x4xf32> -> vector<1x2x4xf32>
    %351 = vector.extract_strided_slice %350 {offsets = [0, 0, 0], sizes = [1, 2, 1], strides = [1, 1, 1]} : vector<1x2x4xf32> to vector<1x2x1xf32>
    %352 = vector.extract_strided_slice %350 {offsets = [0, 0, 2], sizes = [1, 2, 1], strides = [1, 1, 1]} : vector<1x2x4xf32> to vector<1x2x1xf32>
    %353 = tpu.concatenate %351, %352 in 2 : vector<1x2x1xf32>, vector<1x2x1xf32> -> vector<1x2x2xf32>
    %cst_53 = arith.constant 0.111111112 : f32
    %354 = vector.broadcast %cst_53 : f32 to vector<1x2x2xf32>
    %355 = arith.mulf %353, %354 : vector<1x2x2xf32>
    %cst_54 = arith.constant 0.000000e+00 : f32
    %356 = vector.broadcast %cst_54 : f32 to vector<1x2x1xf32>
    %357 = tpu.concatenate %356, %355, %356 in 2 : vector<1x2x1xf32>, vector<1x2x2xf32>, vector<1x2x1xf32> -> vector<1x2x4xf32>
    %358 = vector.extract_strided_slice %357 {offsets = [0, 0, 0], sizes = [1, 2, 2], strides = [1, 1, 1]} : vector<1x2x4xf32> to vector<1x2x2xf32>
    %359 = vector.extract_strided_slice %357 {offsets = [0, 0, 1], sizes = [1, 2, 2], strides = [1, 1, 1]} : vector<1x2x4xf32> to vector<1x2x2xf32>
    %360 = arith.addf %358, %359 : vector<1x2x2xf32>
    %361 = vector.extract_strided_slice %357 {offsets = [0, 0, 2], sizes = [1, 2, 2], strides = [1, 1, 1]} : vector<1x2x4xf32> to vector<1x2x2xf32>
    %362 = arith.addf %360, %361 : vector<1x2x2xf32>
    %cst_55 = arith.constant 0.000000e+00 : f32
    %363 = vector.broadcast %cst_55 : f32 to vector<1x1x2xf32>
    %364 = tpu.concatenate %363, %362, %363 in 1 : vector<1x1x2xf32>, vector<1x2x2xf32>, vector<1x1x2xf32> -> vector<1x4x2xf32>
    %365 = vector.extract_strided_slice %364 {offsets = [0, 0, 0], sizes = [1, 2, 2], strides = [1, 1, 1]} : vector<1x4x2xf32> to vector<1x2x2xf32>
    %366 = vector.extract_strided_slice %364 {offsets = [0, 1, 0], sizes = [1, 2, 2], strides = [1, 1, 1]} : vector<1x4x2xf32> to vector<1x2x2xf32>
    %367 = arith.addf %365, %366 : vector<1x2x2xf32>
    %368 = vector.extract_strided_slice %364 {offsets = [0, 2, 0], sizes = [1, 2, 2], strides = [1, 1, 1]} : vector<1x4x2xf32> to vector<1x2x2xf32>
    %369 = arith.addf %367, %368 : vector<1x2x2xf32>
    %cst_56 = arith.constant 0.111111112 : f32
    %370 = vector.broadcast %cst_56 : f32 to vector<1x2x2xf32>
    %371 = arith.mulf %369, %370 : vector<1x2x2xf32>
    %cst_57 = arith.constant 0.000000e+00 : f32
    %372 = vector.broadcast %cst_57 : f32 to vector<1x2x1xf32>
    %373 = tpu.concatenate %372, %371, %372 in 2 : vector<1x2x1xf32>, vector<1x2x2xf32>, vector<1x2x1xf32> -> vector<1x2x4xf32>
    %374 = vector.extract_strided_slice %373 {offsets = [0, 0, 0], sizes = [1, 2, 2], strides = [1, 1, 1]} : vector<1x2x4xf32> to vector<1x2x2xf32>
    %375 = vector.extract_strided_slice %373 {offsets = [0, 0, 1], sizes = [1, 2, 2], strides = [1, 1, 1]} : vector<1x2x4xf32> to vector<1x2x2xf32>
    %376 = arith.addf %374, %375 : vector<1x2x2xf32>
    %377 = vector.extract_strided_slice %373 {offsets = [0, 0, 2], sizes = [1, 2, 2], strides = [1, 1, 1]} : vector<1x2x4xf32> to vector<1x2x2xf32>
    %378 = arith.addf %376, %377 : vector<1x2x2xf32>
    %cst_58 = arith.constant 0.000000e+00 : f32
    %379 = vector.broadcast %cst_58 : f32 to vector<1x1x2xf32>
    %380 = tpu.concatenate %379, %378, %379 in 1 : vector<1x1x2xf32>, vector<1x2x2xf32>, vector<1x1x2xf32> -> vector<1x4x2xf32>
    %381 = vector.extract_strided_slice %380 {offsets = [0, 0, 0], sizes = [1, 2, 2], strides = [1, 1, 1]} : vector<1x4x2xf32> to vector<1x2x2xf32>
    %382 = vector.extract_strided_slice %380 {offsets = [0, 1, 0], sizes = [1, 2, 2], strides = [1, 1, 1]} : vector<1x4x2xf32> to vector<1x2x2xf32>
    %383 = arith.addf %381, %382 : vector<1x2x2xf32>
    %384 = vector.extract_strided_slice %380 {offsets = [0, 2, 0], sizes = [1, 2, 2], strides = [1, 1, 1]} : vector<1x4x2xf32> to vector<1x2x2xf32>
    %385 = arith.addf %383, %384 : vector<1x2x2xf32>
    %cst_59 = arith.constant 0.111111112 : f32
    %386 = vector.broadcast %cst_59 : f32 to vector<1x2x2xf32>
    %387 = arith.mulf %385, %386 : vector<1x2x2xf32>
    %cst_60 = arith.constant 0.000000e+00 : f32
    %388 = vector.broadcast %cst_60 : f32 to vector<1x2x1xf32>
    %389 = tpu.concatenate %388, %387, %388 in 2 : vector<1x2x1xf32>, vector<1x2x2xf32>, vector<1x2x1xf32> -> vector<1x2x4xf32>
    %390 = vector.extract_strided_slice %389 {offsets = [0, 0, 0], sizes = [1, 2, 2], strides = [1, 1, 1]} : vector<1x2x4xf32> to vector<1x2x2xf32>
    %391 = vector.extract_strided_slice %389 {offsets = [0, 0, 1], sizes = [1, 2, 2], strides = [1, 1, 1]} : vector<1x2x4xf32> to vector<1x2x2xf32>
    %392 = arith.addf %390, %391 : vector<1x2x2xf32>
    %393 = vector.extract_strided_slice %389 {offsets = [0, 0, 2], sizes = [1, 2, 2], strides = [1, 1, 1]} : vector<1x2x4xf32> to vector<1x2x2xf32>
    %394 = arith.addf %392, %393 : vector<1x2x2xf32>
    %cst_61 = arith.constant 0.000000e+00 : f32
    %395 = vector.broadcast %cst_61 : f32 to vector<1x1x2xf32>
    %396 = tpu.concatenate %395, %394, %395 in 1 : vector<1x1x2xf32>, vector<1x2x2xf32>, vector<1x1x2xf32> -> vector<1x4x2xf32>
    %397 = vector.extract_strided_slice %396 {offsets = [0, 0, 0], sizes = [1, 2, 2], strides = [1, 1, 1]} : vector<1x4x2xf32> to vector<1x2x2xf32>
    %398 = vector.extract_strided_slice %396 {offsets = [0, 1, 0], sizes = [1, 2, 2], strides = [1, 1, 1]} : vector<1x4x2xf32> to vector<1x2x2xf32>
    %399 = arith.addf %397, %398 : vector<1x2x2xf32>
    %400 = vector.extract_strided_slice %396 {offsets = [0, 2, 0], sizes = [1, 2, 2], strides = [1, 1, 1]} : vector<1x4x2xf32> to vector<1x2x2xf32>
    %401 = arith.addf %399, %400 : vector<1x2x2xf32>
    %cst_62 = arith.constant 0.111111112 : f32
    %402 = vector.broadcast %cst_62 : f32 to vector<1x2x2xf32>
    %403 = arith.mulf %401, %402 : vector<1x2x2xf32>
    %cst_63 = arith.constant 0.000000e+00 : f32
    %404 = vector.broadcast %cst_63 : f32 to vector<1x2x1xf32>
    %405 = tpu.concatenate %404, %403, %404 in 2 : vector<1x2x1xf32>, vector<1x2x2xf32>, vector<1x2x1xf32> -> vector<1x2x4xf32>
    %406 = vector.extract_strided_slice %405 {offsets = [0, 0, 0], sizes = [1, 2, 2], strides = [1, 1, 1]} : vector<1x2x4xf32> to vector<1x2x2xf32>
    %407 = vector.extract_strided_slice %405 {offsets = [0, 0, 1], sizes = [1, 2, 2], strides = [1, 1, 1]} : vector<1x2x4xf32> to vector<1x2x2xf32>
    %408 = arith.addf %406, %407 : vector<1x2x2xf32>
    %409 = vector.extract_strided_slice %405 {offsets = [0, 0, 2], sizes = [1, 2, 2], strides = [1, 1, 1]} : vector<1x2x4xf32> to vector<1x2x2xf32>
    %410 = arith.addf %408, %409 : vector<1x2x2xf32>
    %cst_64 = arith.constant 0.000000e+00 : f32
    %411 = vector.broadcast %cst_64 : f32 to vector<1x1x2xf32>
    %412 = tpu.concatenate %411, %410, %411 in 1 : vector<1x1x2xf32>, vector<1x2x2xf32>, vector<1x1x2xf32> -> vector<1x4x2xf32>
    %413 = vector.extract_strided_slice %412 {offsets = [0, 0, 0], sizes = [1, 2, 2], strides = [1, 1, 1]} : vector<1x4x2xf32> to vector<1x2x2xf32>
    %414 = vector.extract_strided_slice %412 {offsets = [0, 1, 0], sizes = [1, 2, 2], strides = [1, 1, 1]} : vector<1x4x2xf32> to vector<1x2x2xf32>
    %415 = arith.addf %413, %414 : vector<1x2x2xf32>
    %416 = vector.extract_strided_slice %412 {offsets = [0, 2, 0], sizes = [1, 2, 2], strides = [1, 1, 1]} : vector<1x4x2xf32> to vector<1x2x2xf32>
    %417 = arith.addf %415, %416 : vector<1x2x2xf32>
    %cst_65 = arith.constant 0.111111112 : f32
    %418 = vector.broadcast %cst_65 : f32 to vector<1x2x2xf32>
    %419 = arith.mulf %417, %418 : vector<1x2x2xf32>
    %cst_66 = arith.constant 0.000000e+00 : f32
    %420 = vector.broadcast %cst_66 : f32 to vector<1x2x1xf32>
    %421 = tpu.concatenate %420, %419, %420 in 2 : vector<1x2x1xf32>, vector<1x2x2xf32>, vector<1x2x1xf32> -> vector<1x2x4xf32>
    %422 = vector.extract_strided_slice %421 {offsets = [0, 0, 0], sizes = [1, 2, 2], strides = [1, 1, 1]} : vector<1x2x4xf32> to vector<1x2x2xf32>
    %423 = vector.extract_strided_slice %421 {offsets = [0, 0, 1], sizes = [1, 2, 2], strides = [1, 1, 1]} : vector<1x2x4xf32> to vector<1x2x2xf32>
    %424 = arith.addf %422, %423 : vector<1x2x2xf32>
    %425 = vector.extract_strided_slice %421 {offsets = [0, 0, 2], sizes = [1, 2, 2], strides = [1, 1, 1]} : vector<1x2x4xf32> to vector<1x2x2xf32>
    %426 = arith.addf %424, %425 : vector<1x2x2xf32>
    %cst_67 = arith.constant 0.000000e+00 : f32
    %427 = vector.broadcast %cst_67 : f32 to vector<1x1x2xf32>
    %428 = tpu.concatenate %427, %426, %427 in 1 : vector<1x1x2xf32>, vector<1x2x2xf32>, vector<1x1x2xf32> -> vector<1x4x2xf32>
    %429 = vector.extract_strided_slice %428 {offsets = [0, 0, 0], sizes = [1, 2, 2], strides = [1, 1, 1]} : vector<1x4x2xf32> to vector<1x2x2xf32>
    %430 = vector.extract_strided_slice %428 {offsets = [0, 1, 0], sizes = [1, 2, 2], strides = [1, 1, 1]} : vector<1x4x2xf32> to vector<1x2x2xf32>
    %431 = arith.addf %429, %430 : vector<1x2x2xf32>
    %432 = vector.extract_strided_slice %428 {offsets = [0, 2, 0], sizes = [1, 2, 2], strides = [1, 1, 1]} : vector<1x4x2xf32> to vector<1x2x2xf32>
    %433 = arith.addf %431, %432 : vector<1x2x2xf32>
    %cst_68 = arith.constant 0.111111112 : f32
    %434 = vector.broadcast %cst_68 : f32 to vector<1x2x2xf32>
    %435 = arith.mulf %433, %434 : vector<1x2x2xf32>
    %cst_69 = arith.constant 0.000000e+00 : f32
    %436 = vector.broadcast %cst_69 : f32 to vector<1x2x1xf32>
    %437 = tpu.concatenate %436, %435, %436 in 2 : vector<1x2x1xf32>, vector<1x2x2xf32>, vector<1x2x1xf32> -> vector<1x2x4xf32>
    %438 = vector.extract_strided_slice %437 {offsets = [0, 0, 0], sizes = [1, 2, 2], strides = [1, 1, 1]} : vector<1x2x4xf32> to vector<1x2x2xf32>
    %439 = vector.extract_strided_slice %437 {offsets = [0, 0, 1], sizes = [1, 2, 2], strides = [1, 1, 1]} : vector<1x2x4xf32> to vector<1x2x2xf32>
    %440 = arith.addf %438, %439 : vector<1x2x2xf32>
    %441 = vector.extract_strided_slice %437 {offsets = [0, 0, 2], sizes = [1, 2, 2], strides = [1, 1, 1]} : vector<1x2x4xf32> to vector<1x2x2xf32>
    %442 = arith.addf %440, %441 : vector<1x2x2xf32>
    %cst_70 = arith.constant 0.000000e+00 : f32
    %443 = vector.broadcast %cst_70 : f32 to vector<1x1x2xf32>
    %444 = tpu.concatenate %443, %442, %443 in 1 : vector<1x1x2xf32>, vector<1x2x2xf32>, vector<1x1x2xf32> -> vector<1x4x2xf32>
    %445 = vector.extract_strided_slice %444 {offsets = [0, 0, 0], sizes = [1, 2, 2], strides = [1, 1, 1]} : vector<1x4x2xf32> to vector<1x2x2xf32>
    %446 = vector.extract_strided_slice %444 {offsets = [0, 1, 0], sizes = [1, 2, 2], strides = [1, 1, 1]} : vector<1x4x2xf32> to vector<1x2x2xf32>
    %447 = arith.addf %445, %446 : vector<1x2x2xf32>
    %448 = vector.extract_strided_slice %444 {offsets = [0, 2, 0], sizes = [1, 2, 2], strides = [1, 1, 1]} : vector<1x4x2xf32> to vector<1x2x2xf32>
    %449 = arith.addf %447, %448 : vector<1x2x2xf32>
    %cst_71 = arith.constant 0.111111112 : f32
    %450 = vector.broadcast %cst_71 : f32 to vector<1x2x2xf32>
    %451 = arith.mulf %449, %450 : vector<1x2x2xf32>
    %cst_72 = arith.constant 0.000000e+00 : f32
    %452 = vector.broadcast %cst_72 : f32 to vector<1x2x1xf32>
    %453 = tpu.concatenate %452, %451, %452 in 2 : vector<1x2x1xf32>, vector<1x2x2xf32>, vector<1x2x1xf32> -> vector<1x2x4xf32>
    %454 = vector.extract_strided_slice %453 {offsets = [0, 0, 0], sizes = [1, 2, 2], strides = [1, 1, 1]} : vector<1x2x4xf32> to vector<1x2x2xf32>
    %455 = vector.extract_strided_slice %453 {offsets = [0, 0, 1], sizes = [1, 2, 2], strides = [1, 1, 1]} : vector<1x2x4xf32> to vector<1x2x2xf32>
    %456 = arith.addf %454, %455 : vector<1x2x2xf32>
    %457 = vector.extract_strided_slice %453 {offsets = [0, 0, 2], sizes = [1, 2, 2], strides = [1, 1, 1]} : vector<1x2x4xf32> to vector<1x2x2xf32>
    %458 = arith.addf %456, %457 : vector<1x2x2xf32>
    %cst_73 = arith.constant 0.000000e+00 : f32
    %459 = vector.broadcast %cst_73 : f32 to vector<1x1x2xf32>
    %460 = tpu.concatenate %459, %458, %459 in 1 : vector<1x1x2xf32>, vector<1x2x2xf32>, vector<1x1x2xf32> -> vector<1x4x2xf32>
    %461 = vector.extract_strided_slice %460 {offsets = [0, 0, 0], sizes = [1, 2, 2], strides = [1, 1, 1]} : vector<1x4x2xf32> to vector<1x2x2xf32>
    %462 = vector.extract_strided_slice %460 {offsets = [0, 1, 0], sizes = [1, 2, 2], strides = [1, 1, 1]} : vector<1x4x2xf32> to vector<1x2x2xf32>
    %463 = arith.addf %461, %462 : vector<1x2x2xf32>
    %464 = vector.extract_strided_slice %460 {offsets = [0, 2, 0], sizes = [1, 2, 2], strides = [1, 1, 1]} : vector<1x4x2xf32> to vector<1x2x2xf32>
    %465 = arith.addf %463, %464 : vector<1x2x2xf32>
    %cst_74 = arith.constant 0.111111112 : f32
    %466 = vector.broadcast %cst_74 : f32 to vector<1x2x2xf32>
    %467 = arith.mulf %465, %466 : vector<1x2x2xf32>
    %cst_75 = arith.constant 0.000000e+00 : f32
    %468 = vector.broadcast %cst_75 : f32 to vector<1x2x1xf32>
    %469 = tpu.concatenate %468, %467, %468 in 2 : vector<1x2x1xf32>, vector<1x2x2xf32>, vector<1x2x1xf32> -> vector<1x2x4xf32>
    %470 = vector.extract_strided_slice %469 {offsets = [0, 0, 0], sizes = [1, 2, 2], strides = [1, 1, 1]} : vector<1x2x4xf32> to vector<1x2x2xf32>
    %471 = vector.extract_strided_slice %469 {offsets = [0, 0, 1], sizes = [1, 2, 2], strides = [1, 1, 1]} : vector<1x2x4xf32> to vector<1x2x2xf32>
    %472 = arith.addf %470, %471 : vector<1x2x2xf32>
    %473 = vector.extract_strided_slice %469 {offsets = [0, 0, 2], sizes = [1, 2, 2], strides = [1, 1, 1]} : vector<1x2x4xf32> to vector<1x2x2xf32>
    %474 = arith.addf %472, %473 : vector<1x2x2xf32>
    %cst_76 = arith.constant 0.000000e+00 : f32
    %475 = vector.broadcast %cst_76 : f32 to vector<1x1x2xf32>
    %476 = tpu.concatenate %475, %474, %475 in 1 : vector<1x1x2xf32>, vector<1x2x2xf32>, vector<1x1x2xf32> -> vector<1x4x2xf32>
    %477 = vector.extract_strided_slice %476 {offsets = [0, 0, 0], sizes = [1, 2, 2], strides = [1, 1, 1]} : vector<1x4x2xf32> to vector<1x2x2xf32>
    %478 = vector.extract_strided_slice %476 {offsets = [0, 1, 0], sizes = [1, 2, 2], strides = [1, 1, 1]} : vector<1x4x2xf32> to vector<1x2x2xf32>
    %479 = arith.addf %477, %478 : vector<1x2x2xf32>
    %480 = vector.extract_strided_slice %476 {offsets = [0, 2, 0], sizes = [1, 2, 2], strides = [1, 1, 1]} : vector<1x4x2xf32> to vector<1x2x2xf32>
    %481 = arith.addf %479, %480 : vector<1x2x2xf32>
    %cst_77 = arith.constant 0.111111112 : f32
    %482 = vector.broadcast %cst_77 : f32 to vector<1x2x2xf32>
    %483 = arith.mulf %481, %482 : vector<1x2x2xf32>
    %cst_78 = arith.constant 0.000000e+00 : f32
    %484 = vector.broadcast %cst_78 : f32 to vector<1x2x1xf32>
    %485 = tpu.concatenate %484, %483, %484 in 2 : vector<1x2x1xf32>, vector<1x2x2xf32>, vector<1x2x1xf32> -> vector<1x2x4xf32>
    %486 = vector.extract_strided_slice %485 {offsets = [0, 0, 0], sizes = [1, 2, 2], strides = [1, 1, 1]} : vector<1x2x4xf32> to vector<1x2x2xf32>
    %487 = vector.extract_strided_slice %485 {offsets = [0, 0, 1], sizes = [1, 2, 2], strides = [1, 1, 1]} : vector<1x2x4xf32> to vector<1x2x2xf32>
    %488 = arith.addf %486, %487 : vector<1x2x2xf32>
    %489 = vector.extract_strided_slice %485 {offsets = [0, 0, 2], sizes = [1, 2, 2], strides = [1, 1, 1]} : vector<1x2x4xf32> to vector<1x2x2xf32>
    %490 = arith.addf %488, %489 : vector<1x2x2xf32>
    %cst_79 = arith.constant 0.000000e+00 : f32
    %491 = vector.broadcast %cst_79 : f32 to vector<1x1x2xf32>
    %492 = tpu.concatenate %491, %490, %491 in 1 : vector<1x1x2xf32>, vector<1x2x2xf32>, vector<1x1x2xf32> -> vector<1x4x2xf32>
    %493 = vector.extract_strided_slice %492 {offsets = [0, 0, 0], sizes = [1, 2, 2], strides = [1, 1, 1]} : vector<1x4x2xf32> to vector<1x2x2xf32>
    %494 = vector.extract_strided_slice %492 {offsets = [0, 1, 0], sizes = [1, 2, 2], strides = [1, 1, 1]} : vector<1x4x2xf32> to vector<1x2x2xf32>
    %495 = arith.addf %493, %494 : vector<1x2x2xf32>
    %496 = vector.extract_strided_slice %492 {offsets = [0, 2, 0], sizes = [1, 2, 2], strides = [1, 1, 1]} : vector<1x4x2xf32> to vector<1x2x2xf32>
    %497 = arith.addf %495, %496 : vector<1x2x2xf32>
    %cst_80 = arith.constant 0.111111112 : f32
    %498 = vector.broadcast %cst_80 : f32 to vector<1x2x2xf32>
    %499 = arith.mulf %497, %498 : vector<1x2x2xf32>
    %cst_81 = arith.constant 0.000000e+00 : f32
    %500 = vector.broadcast %cst_81 : f32 to vector<1x2x1xf32>
    %501 = tpu.concatenate %500, %499, %500 in 2 : vector<1x2x1xf32>, vector<1x2x2xf32>, vector<1x2x1xf32> -> vector<1x2x4xf32>
    %502 = vector.extract_strided_slice %501 {offsets = [0, 0, 0], sizes = [1, 2, 2], strides = [1, 1, 1]} : vector<1x2x4xf32> to vector<1x2x2xf32>
    %503 = vector.extract_strided_slice %501 {offsets = [0, 0, 1], sizes = [1, 2, 2], strides = [1, 1, 1]} : vector<1x2x4xf32> to vector<1x2x2xf32>
    %504 = arith.addf %502, %503 : vector<1x2x2xf32>
    %505 = vector.extract_strided_slice %501 {offsets = [0, 0, 2], sizes = [1, 2, 2], strides = [1, 1, 1]} : vector<1x2x4xf32> to vector<1x2x2xf32>
    %506 = arith.addf %504, %505 : vector<1x2x2xf32>
    %cst_82 = arith.constant 0.000000e+00 : f32
    %507 = vector.broadcast %cst_82 : f32 to vector<1x1x2xf32>
    %508 = tpu.concatenate %507, %506, %507 in 1 : vector<1x1x2xf32>, vector<1x2x2xf32>, vector<1x1x2xf32> -> vector<1x4x2xf32>
    %509 = vector.extract_strided_slice %508 {offsets = [0, 0, 0], sizes = [1, 2, 2], strides = [1, 1, 1]} : vector<1x4x2xf32> to vector<1x2x2xf32>
    %510 = vector.extract_strided_slice %508 {offsets = [0, 1, 0], sizes = [1, 2, 2], strides = [1, 1, 1]} : vector<1x4x2xf32> to vector<1x2x2xf32>
    %511 = arith.addf %509, %510 : vector<1x2x2xf32>
    %512 = vector.extract_strided_slice %508 {offsets = [0, 2, 0], sizes = [1, 2, 2], strides = [1, 1, 1]} : vector<1x4x2xf32> to vector<1x2x2xf32>
    %513 = arith.addf %511, %512 : vector<1x2x2xf32>
    %cst_83 = arith.constant 0.111111112 : f32
    %514 = vector.broadcast %cst_83 : f32 to vector<1x2x2xf32>
    %515 = arith.mulf %513, %514 : vector<1x2x2xf32>
    %cst_84 = arith.constant 0.000000e+00 : f32
    %516 = vector.broadcast %cst_84 : f32 to vector<1x2x1xf32>
    %517 = tpu.concatenate %516, %515, %516 in 2 : vector<1x2x1xf32>, vector<1x2x2xf32>, vector<1x2x1xf32> -> vector<1x2x4xf32>
    %518 = vector.extract_strided_slice %517 {offsets = [0, 0, 0], sizes = [1, 2, 2], strides = [1, 1, 1]} : vector<1x2x4xf32> to vector<1x2x2xf32>
    %519 = vector.extract_strided_slice %517 {offsets = [0, 0, 1], sizes = [1, 2, 2], strides = [1, 1, 1]} : vector<1x2x4xf32> to vector<1x2x2xf32>
    %520 = arith.addf %518, %519 : vector<1x2x2xf32>
    %521 = vector.extract_strided_slice %517 {offsets = [0, 0, 2], sizes = [1, 2, 2], strides = [1, 1, 1]} : vector<1x2x4xf32> to vector<1x2x2xf32>
    %522 = arith.addf %520, %521 : vector<1x2x2xf32>
    %cst_85 = arith.constant 0.000000e+00 : f32
    %523 = vector.broadcast %cst_85 : f32 to vector<1x1x2xf32>
    %524 = tpu.concatenate %523, %522, %523 in 1 : vector<1x1x2xf32>, vector<1x2x2xf32>, vector<1x1x2xf32> -> vector<1x4x2xf32>
    %525 = vector.extract_strided_slice %524 {offsets = [0, 0, 0], sizes = [1, 2, 2], strides = [1, 1, 1]} : vector<1x4x2xf32> to vector<1x2x2xf32>
    %526 = vector.extract_strided_slice %524 {offsets = [0, 1, 0], sizes = [1, 2, 2], strides = [1, 1, 1]} : vector<1x4x2xf32> to vector<1x2x2xf32>
    %527 = arith.addf %525, %526 : vector<1x2x2xf32>
    %528 = vector.extract_strided_slice %524 {offsets = [0, 2, 0], sizes = [1, 2, 2], strides = [1, 1, 1]} : vector<1x4x2xf32> to vector<1x2x2xf32>
    %529 = arith.addf %527, %528 : vector<1x2x2xf32>
    %cst_86 = arith.constant 0.111111112 : f32
    %530 = vector.broadcast %cst_86 : f32 to vector<1x2x2xf32>
    %531 = arith.mulf %529, %530 : vector<1x2x2xf32>
    %c0_87 = arith.constant 0 : index
    %c0_88 = arith.constant 0 : index
    %c0_89 = arith.constant 0 : index
    %532 = vector.load %arg3[%c0_87, %c0_88, %c0_89] : memref<1x2x2xf32, #tpu.memory_space<vmem>>, vector<1x2x2xf32>
    tpu.vector_store %arg3[%c0_87, %c0_88, %c0_89], %531 {strides = array<i32>} : memref<1x2x2xf32, #tpu.memory_space<vmem>>, vector<1x2x2xf32>,
    return
  }
  func.func @transform_0(%arg0: i32) -> (i32, i32, i32) {
    %c0_i32 = arith.constant 0 : i32
    %c0_i32_0 = arith.constant 0 : i32
    %c0_i32_1 = arith.constant 0 : i32
    return %arg0, %c0_i32, %c0_i32_0 : i32, i32, i32
  }
  func.func @transform_1(%arg0: i32) -> (i32, i32, i32) {
    %c0_i32 = arith.constant 0 : i32
    %c0_i32_0 = arith.constant 0 : i32
    %c0_i32_1 = arith.constant 0 : i32
    return %arg0, %c0_i32, %c0_i32_0 : i32, i32, i32
  }
  func.func @transform_2(%arg0: i32) -> (i32, i32, i32) {
    %c0_i32 = arith.constant 0 : i32
    %c0_i32_0 = arith.constant 0 : i32
    %c0_i32_1 = arith.constant 0 : i32
    return %arg0, %c0_i32, %c0_i32_0 : i32, i32, i32
  }
}

</mosaic_0001>

<llo_original>
// kernel: colornet_rgb_forward.1
$region0: #{colornet_rgb_forward.1}
  #allocation0 [shape = 'u32[]', space=smem, size = 0x4, offset = 0x4, fixed_abs, tag = 'smem constant byte address 0x4 - core index']
  #allocation1 [shape = 'u32[72,128]{1,0:T(1,128)}', space=vmem, size = 0x9000, scoped, tag = 'internal scratch']
  %s0 = inlined_call_operand.hbm [shape: f32[6,32,32], index: 0, kind: input, shape index: {}]
  %s1 = inlined_call_operand.hbm [shape: f32[6,4,4], index: 1, kind: output, shape index: {0}]
  %s2 = inlined_call_operand.vmem [shape: f32[6,2,2], index: 2, kind: output, shape index: {1}]
  %3 = xla_tuple %s1, %s2
  %s4 = sld [smem:[#allocation0]]
  $region49: #{colornet_rgb_forward.1} parent=0
    _
  %s6 = ssub.s32 1, %s4
  %s7 = scalar_select 0, %s6, %s4
  $region1: #{colornet_rgb_forward.1} parent=0
    #allocation2 [shape = 'u8[32768]{0}', space=vmem, size = 0x8000, scoped, tag = 'input window, operand 0']
    #allocation3 [shape = 's32[2]{0}', space=sflag, size = 0x8, scoped, tag = 'scoped memory for colornet_rgb_forward.1']
    #allocation4 [shape = 's32[2]{0}', space=sflag, size = 0x8, scoped, tag = 'scoped memory for colornet_rgb_forward.1']
    #allocation5 [shape = 'u8[4096]{0}', space=vmem, size = 0x1000, scoped, tag = 'output window, operand 0']
    %8 = vsyncpa [#allocation3], 0
    %s9 = scalar_lea.sflag [#allocation3], 1
    %10 = vsyncpa %s9, 0
    %11 = vsyncpa [#allocation4], 0
    %s12 = scalar_lea.sflag [#allocation4], 1
    %13 = vsyncpa %s12, 0
    loop: start=0, step=1, limit=8
    $region2: #{colornet_rgb_forward.1} parent=1 // loop_pre_header
      _
    $region3: #{colornet_rgb_forward.1} parent=1 // loop_header
      %s15 = sphi 0, %s19
      %p16 = scmp.ge.s32.totalorder %s15, 8
      %s25 = sphi 0, %s27
      %s28 = sphi 0, %s25
      %s29 = sphi 0, %s28
      %s45 = sphi 0, %s29
      %s51 = sphi 0, %s53
      %s54 = sphi 0, %s51
      %s55 = sphi 0, %s54
      %s71 = sphi 0, %s55
      %s77 = sphi 0, %s79
      %s80 = sphi 0, %s77
      %s81 = sphi 0, %s80
      %s97 = sphi 0, %s81
    $region4: #{colornet_rgb_forward.1} parent=1 // loop_header_branch
      %18 = sbr.rel (%p16) target = $region8
    $region5: #{colornet_rgb_forward.1} parent=1 // loop_body
      %s20 = ssub.s32 %s15, 1
      %s21 = ssub.s32 %s15, 2
      %s22 = sadd.s32 %s15, 1
      %s23 = ssub.s32 %s15, %s22
      %p24 = scmp.eq.s32.totalorder %s23, 0
      %s26 = sadd.s32 %s25, 1
      %s27 = scalar_select %p24, %s25, %s26
      %p30 = pneg %p24
      %p31 = scmp.eq.s32.totalorder %s15, 5
      %p32 = por %p30, %p31
      %p33 = scmp.ne.s32.totalorder %s25, %s28
      %p34 = scmp.eq.s32.totalorder %s15, 0
      %p35 = por %p33, %p34
      %p36 = scmp.ne.s32.totalorder %s25, %s28
      %p37 = scmp.eq.s32.totalorder %s20, 5
      %p38 = por %p36, %p37
      %p39 = scmp.ne.s32.totalorder %s28, %s29
      %p40 = scmp.eq.s32.totalorder %s20, 0
      %p41 = por %p39, %p40
      %p42 = scmp.ne.s32.totalorder %s28, %s29
      %p43 = scmp.eq.s32.totalorder %s21, 5
      %p44 = por %p42, %p43
      %p46 = scmp.ne.s32.totalorder %s29, %s45
      %p47 = scmp.eq.s32.totalorder %s21, 0
      %p48 = por %p46, %p47
      %s49 = ssub.s32 %s15, %s22
      %p50 = scmp.eq.s32.totalorder %s49, 0
      %s52 = sadd.s32 %s51, 1
      %s53 = scalar_select %p50, %s51, %s52
      %p56 = pneg %p50
      %p57 = scmp.eq.s32.totalorder %s15, 5
      %p58 = por %p56, %p57
      %p59 = scmp.ne.s32.totalorder %s51, %s54
      %p60 = scmp.eq.s32.totalorder %s15, 0
      %p61 = por %p59, %p60
      %p62 = scmp.ne.s32.totalorder %s51, %s54
      %p63 = scmp.eq.s32.totalorder %s20, 5
      %p64 = por %p62, %p63
      %p65 = scmp.ne.s32.totalorder %s54, %s55
      %p66 = scmp.eq.s32.totalorder %s20, 0
      %p67 = por %p65, %p66
      %p68 = scmp.ne.s32.totalorder %s54, %s55
      %p69 = scmp.eq.s32.totalorder %s21, 5
      %p70 = por %p68, %p69
      %p72 = scmp.ne.s32.totalorder %s55, %s71
      %p73 = scmp.eq.s32.totalorder %s21, 0
      %p74 = por %p72, %p73
      %s75 = ssub.s32 %s15, %s22
      %p76 = scmp.eq.s32.totalorder %s75, 0
      %s78 = sadd.s32 %s77, 1
      %s79 = scalar_select %p76, %s77, %s78
      %p82 = pneg %p76
      %p83 = scmp.eq.s32.totalorder %s15, 5
      %p84 = por %p82, %p83
      %p85 = scmp.ne.s32.totalorder %s77, %s80
      %p86 = scmp.eq.s32.totalorder %s15, 0
      %p87 = por %p85, %p86
      %p88 = scmp.ne.s32.totalorder %s77, %s80
      %p89 = scmp.eq.s32.totalorder %s20, 5
      %p90 = por %p88, %p89
      %p91 = scmp.ne.s32.totalorder %s80, %s81
      %p92 = scmp.eq.s32.totalorder %s20, 0
      %p93 = por %p91, %p92
      %p94 = scmp.ne.s32.totalorder %s80, %s81
      %p95 = scmp.eq.s32.totalorder %s21, 5
      %p96 = por %p94, %p95
      %p98 = scmp.ne.s32.totalorder %s81, %s97
      %p99 = scmp.eq.s32.totalorder %s21, 0
      %p100 = por %p98, %p99
      %p101 = scmp.le.s32.totalorder 1, %s15
      %p102 = scmp.lt.s32.totalorder %s15, 7
      %p103 = pnand %p101, %p102
      %p104 = pneg %p103
      // Predicated region
      $region9: #{colornet_rgb_forward.1} parent=5 // pred_check
        _
      $region10: #{colornet_rgb_forward.1} parent=5 // pred_check_branch
        %106 = sbr.rel (%p103) target = $region12
      $region11: #{colornet_rgb_forward.1} parent=5 // pred_region
        %s107 = ssub.s32 %s15, 1
      $region12: #{colornet_rgb_forward.1} parent=5 // pred_fallthru
        _
      %p108 = scmp.lt.s32.totalorder %s15, 6
      // Predicated region
      $region13: #{colornet_rgb_forward.1} parent=5 // pred_check
        %p109 = pneg %p108
      $region14: #{colornet_rgb_forward.1} parent=5 // pred_check_branch
        %111 = sbr.rel (%p109) target = $region16
      $region15: #{colornet_rgb_forward.1} parent=5 // pred_region
        // Predicated region
        $region17: #{colornet_rgb_forward.1} parent=15 // pred_check
          %p112 = pneg %p35
        $region18: #{colornet_rgb_forward.1} parent=15 // pred_check_branch
          %114 = sbr.rel (%p112) target = $region20
        $region19: #{colornet_rgb_forward.1} parent=15 // pred_region
          %s115 = sand.u32 %s25, 1
          %s116 = scalar_lea.sflag [#allocation3], %s115
          %s117 = sand.u32 %s25, 1
          %s118 = smul.addr %s117, 32
          %s119 = scalar_lea.vmem [#allocation2], %s118
          %121 = vsyncadd %s116, 0
          %s122 = smul.addr %s15, 4
          %s123 = smul.addr %s122, 8
          %s124 = scalar_lea.hbm %s0, %s123
          %s125 = sshll.u32 %s124, 4
          %s126 = int_to_ptr.hbm [resolvable:$true] %s125
          %s127 = sshll.u32 %s119, 4
          %s128 = int_to_ptr.vmem [resolvable:$true] %s127
          %133 = dma.hbm_to_vmem [thread:$0]  %s126, 512, %s128, %s116, 128, 128, 8
        $region20: #{colornet_rgb_forward.1} parent=15 // pred_fallthru
          _
      $region16: #{colornet_rgb_forward.1} parent=5 // pred_fallthru
        _
      %p134 = scmp.le.s32.totalorder 1, %s15
      %p135 = scmp.lt.s32.totalorder %s15, 7
      %p136 = pnand %p134, %p135
      %p137 = pneg %p136
      // Predicated region
      $region21: #{colornet_rgb_forward.1} parent=5 // pred_check
        _
      $region22: #{colornet_rgb_forward.1} parent=5 // pred_check_branch
        %139 = sbr.rel (%p136) target = $region24
      $region23: #{colornet_rgb_forward.1} parent=5 // pred_region
        %s140 = ssub.s32 %s15, 1
        %s141 = sand.u32 %s28, 1
        %s142 = scalar_lea.sflag [#allocation3], %s141
        %s143 = sand.u32 %s28, 1
        %s144 = smul.addr %s143, 32
        %s145 = scalar_lea.vmem [#allocation2], %s144
        // Predicated region
        $region25: #{colornet_rgb_forward.1} parent=23 // pred_check
          %p146 = pneg %p41
        $region26: #{colornet_rgb_forward.1} parent=23 // pred_check_branch
          %148 = sbr.rel (%p146) target = $region28
        $region27: #{colornet_rgb_forward.1} parent=23 // pred_region
          %150 = dma.done %s142, 512
        $region28: #{colornet_rgb_forward.1} parent=23 // pred_fallthru
          _
        %s151 = sand.u32 %s28, 1
        %s152 = scalar_lea.sflag [#allocation3], %s151
        %s153 = sand.u32 %s28, 1
        %s154 = smul.addr %s153, 32
        %s155 = scalar_lea.vmem [#allocation2], %s154
        %p156 = pneg %p41
        %p157 = pneg %p38
        %p158 = pneg %p67
        %p159 = pneg %p64
        %s160 = sand.u32 %s54, 1
        %s161 = scalar_lea.sflag [#allocation4], %s160
        %s162 = sand.u32 %s54, 1
        %s163 = smul.addr %s162, 4
        %s164 = scalar_lea.vmem [#allocation5], %s163
        %p165 = pneg %p93
        %p166 = pneg %p90
        %p167 = scmp.lt.s32.totalorder %s20, 5
        %s168 = scalar_select %p167, %s20, 5
        %s169 = smul.addr %s168, 2
        %s170 = scalar_lea.vmem %s2, %s169
        %p171 = scmp.lt.s32.totalorder %s20, 5
        %s172 = scalar_select %p171, %s20, 5
        %s173 = smul.addr %s172, 2
        %s174 = scalar_lea.vmem %s2, %s173
        %v175 = vld [vmem:[%s145] sm:$0xff]
        %v176 = vld [vmem:[%s145 + $0x8] sm:$0xff]
        %v177 = vld [vmem:[%s145 + $0x10] sm:$0xff]
        %v178 = vld [vmem:[%s145 + $0x18] sm:$0xff]
        %183 = vrot.lane.b32.xlu0 %v175, 3
        %v184 = vpop.permute.xlu0 %183
        %185 = vrot.lane.b32.xlu0 %v176, 3
        %v186 = vpop.permute.xlu0 %185
        %187 = vrot.lane.b32.xlu0 %v177, 3
        %v188 = vpop.permute.xlu0 %187
        %189 = vrot.lane.b32.xlu0 %v178, 3
        %v190 = vpop.permute.xlu0 %189
        %vm195 = vcmask 23552
        %v196 = vsel %vm195, 0.0, %v184
        %v197 = vsel %vm195, 0.0, %v186
        %v198 = vsel %vm195, 0.0, %v188
        %v199 = vsel %vm195, 0.0, %v190
        %vm200 = vcmask 285696
        %v201 = vsel %vm200, %v196, 0.0
        %v202 = vsel %vm200, %v197, 0.0
        %v203 = vsel %vm200, %v198, 0.0
        %v204 = vsel %vm200, %v199, 0.0
        %209 = vrot.lane.b32.xlu0 %v201, 127
        %v210 = vpop.permute.xlu0 %209
        %211 = vrot.lane.b32.xlu0 %v202, 127
        %v212 = vpop.permute.xlu0 %211
        %213 = vrot.lane.b32.xlu0 %v203, 127
        %v214 = vpop.permute.xlu0 %213
        %215 = vrot.lane.b32.xlu0 %v204, 127
        %v216 = vpop.permute.xlu0 %215
        %v221 = vadd.f32 %v201, %v210
        %v222 = vadd.f32 %v202, %v212
        %v223 = vadd.f32 %v203, %v214
        %v224 = vadd.f32 %v204, %v216
        %225 = vrot.lane.b32.xlu0 %v201, 126
        %v226 = vpop.permute.xlu0 %225
        %227 = vrot.lane.b32.xlu0 %v202, 126
        %v228 = vpop.permute.xlu0 %227
        %229 = vrot.lane.b32.xlu0 %v203, 126
        %v230 = vpop.permute.xlu0 %229
        %231 = vrot.lane.b32.xlu0 %v204, 126
        %v232 = vpop.permute.xlu0 %231
        %v237 = vadd.f32 %v221, %v226
        %v238 = vadd.f32 %v222, %v228
        %v239 = vadd.f32 %v223, %v230
        %v240 = vadd.f32 %v224, %v232
        %241 = vrot.lane.b32.xlu0 %v201, 125
        %v242 = vpop.permute.xlu0 %241
        %243 = vrot.lane.b32.xlu0 %v202, 125
        %v244 = vpop.permute.xlu0 %243
        %245 = vrot.lane.b32.xlu0 %v203, 125
        %v246 = vpop.permute.xlu0 %245
        %247 = vrot.lane.b32.xlu0 %v204, 125
        %v248 = vpop.permute.xlu0 %247
        %v253 = vadd.f32 %v237, %v242
        %v254 = vadd.f32 %v238, %v244
        %v255 = vadd.f32 %v239, %v246
        %v256 = vadd.f32 %v240, %v248
        %257 = vrot.lane.b32.xlu0 %v201, 124
        %v258 = vpop.permute.xlu0 %257
        %259 = vrot.lane.b32.xlu0 %v202, 124
        %v260 = vpop.permute.xlu0 %259
        %261 = vrot.lane.b32.xlu0 %v203, 124
        %v262 = vpop.permute.xlu0 %261
        %263 = vrot.lane.b32.xlu0 %v204, 124
        %v264 = vpop.permute.xlu0 %263
        %v269 = vadd.f32 %v253, %v258
        %v270 = vadd.f32 %v254, %v260
        %v271 = vadd.f32 %v255, %v262
        %v272 = vadd.f32 %v256, %v264
        %273 = vrot.lane.b32.xlu0 %v201, 123
        %v274 = vpop.permute.xlu0 %273
        %275 = vrot.lane.b32.xlu0 %v202, 123
        %v276 = vpop.permute.xlu0 %275
        %277 = vrot.lane.b32.xlu0 %v203, 123
        %v278 = vpop.permute.xlu0 %277
        %279 = vrot.lane.b32.xlu0 %v204, 123
        %v280 = vpop.permute.xlu0 %279
        %v285 = vadd.f32 %v269, %v274
        %v286 = vadd.f32 %v270, %v276
        %v287 = vadd.f32 %v271, %v278
        %v288 = vadd.f32 %v272, %v280
        %289 = vrot.lane.b32.xlu0 %v201, 122
        %v290 = vpop.permute.xlu0 %289
        %291 = vrot.lane.b32.xlu0 %v202, 122
        %v292 = vpop.permute.xlu0 %291
        %293 = vrot.lane.b32.xlu0 %v203, 122
        %v294 = vpop.permute.xlu0 %293
        %295 = vrot.lane.b32.xlu0 %v204, 122
        %v296 = vpop.permute.xlu0 %295
        %v301 = vadd.f32 %v285, %v290
        %v302 = vadd.f32 %v286, %v292
        %v303 = vadd.f32 %v287, %v294
        %v304 = vadd.f32 %v288, %v296
        %vm309 = vcmask 1042432
        %v310 = vrot.slane %v301, 5
        %v311 = vrot.slane %v302, 5
        %v312 = vsel %vm309, %v310, %v311
        %v313 = vrot.slane %v303, 5
        %v314 = vsel %vm309, %v311, %v313
        %v315 = vrot.slane %v304, 5
        %v316 = vsel %vm309, %v313, %v315
        %v322 = vsel %vm309, 0.0, %v310
        %v323 = vsel %vm309, %v315, 0.0
        %vm326 = vcmask 1046528
        %v327 = vrot.slane %v322, 1
        %v328 = vrot.slane %v312, 1
        %v329 = vsel %vm326, %v327, %v328
        %v330 = vrot.slane %v314, 1
        %v331 = vsel %vm326, %v328, %v330
        %v332 = vrot.slane %v316, 1
        %v333 = vsel %vm326, %v330, %v332
        %v334 = vrot.slane %v323, 1
        %v335 = vsel %vm326, %v332, %v334
        %v340 = vadd.f32 %v322, %v329
        %v341 = vadd.f32 %v312, %v331
        %v342 = vadd.f32 %v314, %v333
        %v343 = vadd.f32 %v316, %v335
        %vm344 = vcmask 1045504
        %v345 = vrot.slane %v322, 2
        %v346 = vrot.slane %v312, 2
        %v347 = vsel %vm344, %v345, %v346
        %v348 = vrot.slane %v314, 2
        %v349 = vsel %vm344, %v346, %v348
        %v350 = vrot.slane %v316, 2
        %v351 = vsel %vm344, %v348, %v350
        %v352 = vrot.slane %v323, 2
        %v353 = vsel %vm344, %v350, %v352
        %v358 = vadd.f32 %v340, %v347
        %v359 = vadd.f32 %v341, %v349
        %v360 = vadd.f32 %v342, %v351
        %v361 = vadd.f32 %v343, %v353
        %vm362 = vcmask 1044480
        %v363 = vrot.slane %v322, 3
        %v364 = vrot.slane %v312, 3
        %v365 = vsel %vm362, %v363, %v364
        %v366 = vrot.slane %v314, 3
        %v367 = vsel %vm362, %v364, %v366
        %v368 = vrot.slane %v316, 3
        %v369 = vsel %vm362, %v366, %v368
        %v370 = vrot.slane %v323, 3
        %v371 = vsel %vm362, %v368, %v370
        %v376 = vadd.f32 %v358, %v365
        %v377 = vadd.f32 %v359, %v367
        %v378 = vadd.f32 %v360, %v369
        %v379 = vadd.f32 %v361, %v371
        %vm380 = vcmask 1043456
        %v381 = vrot.slane %v322, 4
        %v382 = vrot.slane %v312, 4
        %v383 = vsel %vm380, %v381, %v382
        %v384 = vrot.slane %v314, 4
        %v385 = vsel %vm380, %v382, %v384
        %v386 = vrot.slane %v316, 4
        %v387 = vsel %vm380, %v384, %v386
        %v388 = vrot.slane %v323, 4
        %v389 = vsel %vm380, %v386, %v388
        %v394 = vadd.f32 %v376, %v383
        %v395 = vadd.f32 %v377, %v385
        %v396 = vadd.f32 %v378, %v387
        %v397 = vadd.f32 %v379, %v389
        %v398 = vrot.slane %v322, 5
        %v399 = vrot.slane %v312, 5
        %v400 = vsel %vm309, %v398, %v399
        %v401 = vrot.slane %v314, 5
        %v402 = vsel %vm309, %v399, %v401
        %v403 = vrot.slane %v316, 5
        %v404 = vsel %vm309, %v401, %v403
        %v405 = vrot.slane %v323, 5
        %v406 = vsel %vm309, %v403, %v405
        %v411 = vadd.f32 %v394, %v400
        %v412 = vadd.f32 %v395, %v402
        %v413 = vadd.f32 %v396, %v404
        %v414 = vadd.f32 %v397, %v406
        %vm415 = vcmask 1041408
        %v416 = vrot.slane %v322, 6
        %v417 = vrot.slane %v312, 6
        %v418 = vsel %vm415, %v416, %v417
        %v419 = vrot.slane %v314, 6
        %v420 = vsel %vm415, %v417, %v419
        %v421 = vrot.slane %v316, 6
        %v422 = vsel %vm415, %v419, %v421
        %v423 = vrot.slane %v323, 6
        %v424 = vsel %vm415, %v421, %v423
        %v429 = vadd.f32 %v411, %v418
        %v430 = vadd.f32 %v412, %v420
        %v431 = vadd.f32 %v413, %v422
        %v432 = vadd.f32 %v414, %v424
        %v434 = vrot.slane %v429, 1
        %v436 = vrot.slane %v429, 2
        %v438 = vrot.slane %v429, 3
        %v441 = vrot.slane %v430, 4
        %v443 = vrot.slane %v430, 5
        %v445 = vrot.slane %v430, 6
        %v447 = vrot.slane %v430, 7
        %v450 = vrot.slane %v431, 1
        %v452 = vrot.slane %v431, 2
        %v454 = vrot.slane %v431, 3
        %v457 = vrot.slane %v432, 4
        %v459 = vrot.slane %v432, 5
        %v461 = vrot.slane %v432, 6
        %v463 = vrot.slane %v432, 7
        %vm465 = vcmask 1040384
        %v466 = vsel %vm465, %v429, %v434
        %v467 = vsel %vm415, %v466, %v436
        %v468 = vsel %vm309, %v467, %v438
        %v469 = vsel %vm380, %v468, %v441
        %v470 = vsel %vm362, %v469, %v443
        %v471 = vsel %vm344, %v470, %v445
        %v472 = vsel %vm326, %v471, %v447
        %v473 = vsel %vm465, %v431, %v450
        %v474 = vsel %vm415, %v473, %v452
        %v475 = vsel %vm309, %v474, %v454
        %v476 = vsel %vm380, %v475, %v457
        %v477 = vsel %vm362, %v476, %v459
        %v478 = vsel %vm344, %v477, %v461
        %v479 = vsel %vm326, %v478, %v463
        %482 = vrot.lane.b32.xlu0 %v472, 127
        %v483 = vpop.permute.xlu0 %482
        %484 = vrot.lane.b32.xlu0 %v479, 127
        %v485 = vpop.permute.xlu0 %484
        %488 = vrot.lane.b32.xlu0 %v472, 126
        %v489 = vpop.permute.xlu0 %488
        %490 = vrot.lane.b32.xlu0 %v479, 126
        %v491 = vpop.permute.xlu0 %490
        %494 = vrot.lane.b32.xlu0 %v472, 125
        %v495 = vpop.permute.xlu0 %494
        %496 = vrot.lane.b32.xlu0 %v479, 125
        %v497 = vpop.permute.xlu0 %496
        %500 = vrot.lane.b32.xlu0 %v472, 124
        %v501 = vpop.permute.xlu0 %500
        %502 = vrot.lane.b32.xlu0 %v479, 124
        %v503 = vpop.permute.xlu0 %502
        %506 = vrot.lane.b32.xlu0 %v472, 123
        %v507 = vpop.permute.xlu0 %506
        %508 = vrot.lane.b32.xlu0 %v479, 123
        %v509 = vpop.permute.xlu0 %508
        %512 = vrot.lane.b32.xlu0 %v472, 122
        %v513 = vpop.permute.xlu0 %512
        %514 = vrot.lane.b32.xlu0 %v479, 122
        %v515 = vpop.permute.xlu0 %514
        %518 = vrot.lane.b32.xlu0 %v472, 121
        %v519 = vpop.permute.xlu0 %518
        %520 = vrot.lane.b32.xlu0 %v479, 121
        %v521 = vpop.permute.xlu0 %520
        %524 = vrot.lane.b32.xlu0 %v472, 120
        %v525 = vpop.permute.xlu0 %524
        %526 = vrot.lane.b32.xlu0 %v479, 120
        %v527 = vpop.permute.xlu0 %526
        %530 = vrot.lane.b32.xlu0 %v472, 119
        %v531 = vpop.permute.xlu0 %530
        %532 = vrot.lane.b32.xlu0 %v479, 119
        %v533 = vpop.permute.xlu0 %532
        %536 = vrot.lane.b32.xlu0 %v472, 118
        %v537 = vpop.permute.xlu0 %536
        %538 = vrot.lane.b32.xlu0 %v479, 118
        %v539 = vpop.permute.xlu0 %538
        %542 = vrot.lane.b32.xlu0 %v472, 117
        %v543 = vpop.permute.xlu0 %542
        %544 = vrot.lane.b32.xlu0 %v479, 117
        %v545 = vpop.permute.xlu0 %544
        %548 = vrot.lane.b32.xlu0 %v472, 116
        %v549 = vpop.permute.xlu0 %548
        %550 = vrot.lane.b32.xlu0 %v479, 116
        %v551 = vpop.permute.xlu0 %550
        %554 = vrot.lane.b32.xlu0 %v472, 115
        %v555 = vpop.permute.xlu0 %554
        %556 = vrot.lane.b32.xlu0 %v479, 115
        %v557 = vpop.permute.xlu0 %556
        %560 = vrot.lane.b32.xlu0 %v472, 114
        %v561 = vpop.permute.xlu0 %560
        %562 = vrot.lane.b32.xlu0 %v479, 114
        %v563 = vpop.permute.xlu0 %562
        %566 = vrot.lane.b32.xlu0 %v472, 113
        %v567 = vpop.permute.xlu0 %566
        %568 = vrot.lane.b32.xlu0 %v479, 113
        %v569 = vpop.permute.xlu0 %568
        %vm572 = vcmask 7168
        %v573 = vsel %vm572, %v472, %v483
        %v574 = vsel %vm572, %v479, %v485
        %vm575 = vcmask 15360
        %v576 = vsel %vm575, %v573, %v489
        %v577 = vsel %vm575, %v574, %v491
        %v578 = vsel %vm195, %v576, %v495
        %v579 = vsel %vm195, %v577, %v497
        %vm580 = vcmask 31744
        %v581 = vsel %vm580, %v578, %v501
        %v582 = vsel %vm580, %v579, %v503
        %vm583 = vcmask 39936
        %v584 = vsel %vm583, %v581, %v507
        %v585 = vsel %vm583, %v582, %v509
        %vm586 = vcmask 48128
        %v587 = vsel %vm586, %v584, %v513
        %v588 = vsel %vm586, %v585, %v515
        %vm589 = vcmask 56320
        %v590 = vsel %vm589, %v587, %v519
        %v591 = vsel %vm589, %v588, %v521
        %vm592 = vcmask 64512
        %v593 = vsel %vm592, %v590, %v525
        %v594 = vsel %vm592, %v591, %v527
        %vm595 = vcmask 72704
        %v596 = vsel %vm595, %v593, %v531
        %v597 = vsel %vm595, %v594, %v533
        %vm598 = vcmask 80896
        %v599 = vsel %vm598, %v596, %v537
        %v600 = vsel %vm598, %v597, %v539
        %vm601 = vcmask 89088
        %v602 = vsel %vm601, %v599, %v543
        %v603 = vsel %vm601, %v600, %v545
        %vm604 = vcmask 97280
        %v605 = vsel %vm604, %v602, %v549
        %v606 = vsel %vm604, %v603, %v551
        %vm607 = vcmask 105472
        %v608 = vsel %vm607, %v605, %v555
        %v609 = vsel %vm607, %v606, %v557
        %vm610 = vcmask 113664
        %v611 = vsel %vm610, %v608, %v561
        %v612 = vsel %vm610, %v609, %v563
        %vm613 = vcmask 121856
        %v614 = vsel %vm613, %v611, %v567
        %v615 = vsel %vm613, %v612, %v569
        %v616 = vmul.f32 %v614, 0.020408163
        %v617 = vmul.f32 %v615, 0.020408163
        %620 = vrot.lane.b32.xlu0 %v616, 1
        %v621 = vpop.permute.xlu0 %620
        %622 = vrot.lane.b32.xlu0 %v617, 1
        %v623 = vpop.permute.xlu0 %622
        %v626 = vsel %vm572, -inf, %v621
        %v627 = vsel %vm572, -inf, %v623
        %vm628 = vcmask 138240
        %v629 = vsel %vm628, %v626, -inf
        %v630 = vsel %vm628, %v627, -inf
        %633 = vrot.lane.b32.xlu0 %v629, 127
        %v634 = vpop.permute.xlu0 %633
        %635 = vrot.lane.b32.xlu0 %v630, 127
        %v636 = vpop.permute.xlu0 %635
        %v639 = vmax.f32 %v629, %v634
        %v640 = vmax.f32 %v630, %v636
        %641 = vrot.lane.b32.xlu0 %v629, 126
        %v642 = vpop.permute.xlu0 %641
        %643 = vrot.lane.b32.xlu0 %v630, 126
        %v644 = vpop.permute.xlu0 %643
        %v647 = vmax.f32 %v639, %v642
        %v648 = vmax.f32 %v640, %v644
        %v651 = vrot.slane %v647, 7
        %v652 = vrot.slane %v648, 7
        %v653 = vsel %vm465, %v651, %v652
        %v657 = vsel %vm465, -inf, %v651
        %v658 = vsel %vm465, %v652, -inf
        %v661 = vrot.slane %v657, 1
        %v662 = vrot.slane %v653, 1
        %v663 = vsel %vm326, %v661, %v662
        %v664 = vrot.slane %v658, 1
        %v665 = vsel %vm326, %v662, %v664
        %v668 = vmax.f32 %v657, %v663
        %v669 = vmax.f32 %v653, %v665
        %v670 = vrot.slane %v657, 2
        %v671 = vrot.slane %v653, 2
        %v672 = vsel %vm344, %v670, %v671
        %v673 = vrot.slane %v658, 2
        %v674 = vsel %vm344, %v671, %v673
        %v677 = vmax.f32 %v668, %v672
        %v678 = vmax.f32 %v669, %v674
        %v680 = vrot.slane %v677, 1
        %v682 = vrot.slane %v677, 2
        %v684 = vrot.slane %v677, 3
        %v687 = vrot.slane %v678, 4
        %v689 = vrot.slane %v678, 5
        %v691 = vrot.slane %v678, 6
        %v693 = vrot.slane %v678, 7
        %v695 = vsel %vm465, %v677, %v680
        %v696 = vsel %vm415, %v695, %v682
        %v697 = vsel %vm309, %v696, %v684
        %v698 = vsel %vm380, %v697, %v687
        %v699 = vsel %vm362, %v698, %v689
        %v700 = vsel %vm344, %v699, %v691
        %v701 = vsel %vm326, %v700, %v693
        %703 = vrot.lane.b32.xlu0 %v701, 127
        %v704 = vpop.permute.xlu0 %703
        %706 = vrot.lane.b32.xlu0 %v701, 126
        %v707 = vpop.permute.xlu0 %706
        %709 = vrot.lane.b32.xlu0 %v701, 125
        %v710 = vpop.permute.xlu0 %709
        %712 = vrot.lane.b32.xlu0 %v701, 124
        %v713 = vpop.permute.xlu0 %712
        %715 = vrot.lane.b32.xlu0 %v701, 123
        %v716 = vpop.permute.xlu0 %715
        %718 = vrot.lane.b32.xlu0 %v701, 122
        %v719 = vpop.permute.xlu0 %718
        %721 = vrot.lane.b32.xlu0 %v701, 121
        %v722 = vpop.permute.xlu0 %721
        %v724 = vsel %vm572, %v701, %v704
        %v725 = vsel %vm575, %v724, %v707
        %v726 = vsel %vm195, %v725, %v710
        %v727 = vsel %vm580, %v726, %v713
        %v728 = vsel %vm583, %v727, %v716
        %v729 = vsel %vm586, %v728, %v719
        %v730 = vsel %vm589, %v729, %v722
        %732 = vrot.lane.b32.xlu0 %v730, 1
        %v733 = vpop.permute.xlu0 %732
        %v735 = vsel %vm572, 0.0, %v733
        %v736 = vsel %vm595, %v735, 0.0
        %738 = vrot.lane.b32.xlu0 %v736, 127
        %v739 = vpop.permute.xlu0 %738
        %v741 = vadd.f32 %v736, %v739
        %742 = vrot.lane.b32.xlu0 %v736, 126
        %v743 = vpop.permute.xlu0 %742
        %v745 = vadd.f32 %v741, %v743
        %v747 = vrot.slane %v745, 7
        %v749 = vsel %vm465, 0.0, %v747
        %v750 = vsel %vm465, %v747, 0.0
        %v753 = vrot.slane %v749, 1
        %v754 = vrot.slane %v750, 1
        %v755 = vsel %vm326, %v753, %v754
        %v757 = vadd.f32 %v749, %v755
        %v758 = vrot.slane %v749, 2
        %v759 = vrot.slane %v750, 2
        %v760 = vsel %vm344, %v758, %v759
        %v762 = vadd.f32 %v757, %v760
        %v763 = vmul.f32 %v762, 0.11111111
        %765 = vrot.lane.b32.xlu0 %v763, 1
        %v766 = vpop.permute.xlu0 %765
        %v768 = vsel %vm572, 0.0, %v766
        %v769 = vsel %vm595, %v768, 0.0
        %771 = vrot.lane.b32.xlu0 %v769, 127
        %v772 = vpop.permute.xlu0 %771
        %v774 = vadd.f32 %v769, %v772
        %775 = vrot.lane.b32.xlu0 %v769, 126
        %v776 = vpop.permute.xlu0 %775
        %v778 = vadd.f32 %v774, %v776
        %v780 = vrot.slane %v778, 7
        %v782 = vsel %vm465, 0.0, %v780
        %v783 = vsel %vm465, %v780, 0.0
        %v786 = vrot.slane %v782, 1
        %v787 = vrot.slane %v783, 1
        %v788 = vsel %vm326, %v786, %v787
        %v790 = vadd.f32 %v782, %v788
        %v791 = vrot.slane %v782, 2
        %v792 = vrot.slane %v783, 2
        %v793 = vsel %vm344, %v791, %v792
        %v795 = vadd.f32 %v790, %v793
        %v796 = vmul.f32 %v795, 0.11111111
        %798 = vrot.lane.b32.xlu0 %v796, 1
        %v799 = vpop.permute.xlu0 %798
        %v801 = vsel %vm572, 0.0, %v799
        %v802 = vsel %vm595, %v801, 0.0
        %804 = vrot.lane.b32.xlu0 %v802, 127
        %v805 = vpop.permute.xlu0 %804
        %v807 = vadd.f32 %v802, %v805
        %808 = vrot.lane.b32.xlu0 %v802, 126
        %v809 = vpop.permute.xlu0 %808
        %v811 = vadd.f32 %v807, %v809
        %v813 = vrot.slane %v811, 7
        %v815 = vsel %vm465, 0.0, %v813
        %v816 = vsel %vm465, %v813, 0.0
        %v819 = vrot.slane %v815, 1
        %v820 = vrot.slane %v816, 1
        %v821 = vsel %vm326, %v819, %v820
        %v823 = vadd.f32 %v815, %v821
        %v824 = vrot.slane %v815, 2
        %v825 = vrot.slane %v816, 2
        %v826 = vsel %vm344, %v824, %v825
        %v828 = vadd.f32 %v823, %v826
        %v829 = vmul.f32 %v828, 0.11111111
        %831 = vrot.lane.b32.xlu0 %v829, 1
        %v832 = vpop.permute.xlu0 %831
        %v834 = vsel %vm572, 0.0, %v832
        %v835 = vsel %vm595, %v834, 0.0
        %837 = vrot.lane.b32.xlu0 %v835, 127
        %v838 = vpop.permute.xlu0 %837
        %v840 = vadd.f32 %v835, %v838
        %841 = vrot.lane.b32.xlu0 %v835, 126
        %v842 = vpop.permute.xlu0 %841
        %v844 = vadd.f32 %v840, %v842
        %v846 = vrot.slane %v844, 7
        %v848 = vsel %vm465, 0.0, %v846
        %v849 = vsel %vm465, %v846, 0.0
        %v852 = vrot.slane %v848, 1
        %v853 = vrot.slane %v849, 1
        %v854 = vsel %vm326, %v852, %v853
        %v856 = vadd.f32 %v848, %v854
        %v857 = vrot.slane %v848, 2
        %v858 = vrot.slane %v849, 2
        %v859 = vsel %vm344, %v857, %v858
        %v861 = vadd.f32 %v856, %v859
        %v862 = vmul.f32 %v861, 0.11111111
        %864 = vrot.lane.b32.xlu0 %v862, 1
        %v865 = vpop.permute.xlu0 %864
        %v867 = vsel %vm572, 0.0, %v865
        %v868 = vsel %vm595, %v867, 0.0
        %870 = vrot.lane.b32.xlu0 %v868, 127
        %v871 = vpop.permute.xlu0 %870
        %v873 = vadd.f32 %v868, %v871
        %874 = vrot.lane.b32.xlu0 %v868, 126
        %v875 = vpop.permute.xlu0 %874
        %v877 = vadd.f32 %v873, %v875
        %v879 = vrot.slane %v877, 7
        %v881 = vsel %vm465, 0.0, %v879
        %v882 = vsel %vm465, %v879, 0.0
        %v885 = vrot.slane %v881, 1
        %v886 = vrot.slane %v882, 1
        %v887 = vsel %vm326, %v885, %v886
        %v889 = vadd.f32 %v881, %v887
        %v890 = vrot.slane %v881, 2
        %v891 = vrot.slane %v882, 2
        %v892 = vsel %vm344, %v890, %v891
        %v894 = vadd.f32 %v889, %v892
        %v895 = vmul.f32 %v894, 0.11111111
        %897 = vrot.lane.b32.xlu0 %v895, 1
        %v898 = vpop.permute.xlu0 %897
        %v900 = vsel %vm572, 0.0, %v898
        %v901 = vsel %vm595, %v900, 0.0
        %903 = vrot.lane.b32.xlu0 %v901, 127
        %v904 = vpop.permute.xlu0 %903
        %v906 = vadd.f32 %v901, %v904
        %907 = vrot.lane.b32.xlu0 %v901, 126
        %v908 = vpop.permute.xlu0 %907
        %v910 = vadd.f32 %v906, %v908
        %v912 = vrot.slane %v910, 7
        %v914 = vsel %vm465, 0.0, %v912
        %v915 = vsel %vm465, %v912, 0.0
        %v918 = vrot.slane %v914, 1
        %v919 = vrot.slane %v915, 1
        %v920 = vsel %vm326, %v918, %v919
        %v922 = vadd.f32 %v914, %v920
        %v923 = vrot.slane %v914, 2
        %v924 = vrot.slane %v915, 2
        %v925 = vsel %vm344, %v923, %v924
        %v927 = vadd.f32 %v922, %v925
        %v928 = vmul.f32 %v927, 0.11111111
        %930 = vrot.lane.b32.xlu0 %v928, 1
        %v931 = vpop.permute.xlu0 %930
        %v933 = vsel %vm572, 0.0, %v931
        %v934 = vsel %vm595, %v933, 0.0
        %936 = vrot.lane.b32.xlu0 %v934, 127
        %v937 = vpop.permute.xlu0 %936
        %v939 = vadd.f32 %v934, %v937
        %940 = vrot.lane.b32.xlu0 %v934, 126
        %v941 = vpop.permute.xlu0 %940
        %v943 = vadd.f32 %v939, %v941
        %v945 = vrot.slane %v943, 7
        %v947 = vsel %vm465, 0.0, %v945
        %v948 = vsel %vm465, %v945, 0.0
        %v951 = vrot.slane %v947, 1
        %v952 = vrot.slane %v948, 1
        %v953 = vsel %vm326, %v951, %v952
        %v955 = vadd.f32 %v947, %v953
        %v956 = vrot.slane %v947, 2
        %v957 = vrot.slane %v948, 2
        %v958 = vsel %vm344, %v956, %v957
        %v960 = vadd.f32 %v955, %v958
        %v962 = vrot.slane %v960, 1
        %v964 = vrot.slane %v960, 2
        %v966 = vrot.slane %v960, 3
        %v968 = vsel %vm465, %v960, %v962
        %v969 = vsel %vm415, %v968, %v964
        %v970 = vsel %vm309, %v969, %v966
        %972 = vrot.lane.b32.xlu0 %v970, 127
        %v973 = vpop.permute.xlu0 %972
        %975 = vrot.lane.b32.xlu0 %v970, 126
        %v976 = vpop.permute.xlu0 %975
        %978 = vrot.lane.b32.xlu0 %v970, 125
        %v979 = vpop.permute.xlu0 %978
        %v981 = vsel %vm572, %v970, %v973
        %v982 = vsel %vm575, %v981, %v976
        %v983 = vsel %vm195, %v982, %v979
        %v984 = vmul.f32 %v983, 0.11111111
        %986 = vrot.lane.b32.xlu0 %v984, 1
        %v987 = vpop.permute.xlu0 %986
        %v989 = vsel %vm572, 0.0, %v987
        %v990 = vsel %vm583, %v989, 0.0
        %992 = vrot.lane.b32.xlu0 %v990, 127
        %v993 = vpop.permute.xlu0 %992
        %v995 = vadd.f32 %v990, %v993
        %996 = vrot.lane.b32.xlu0 %v990, 126
        %v997 = vpop.permute.xlu0 %996
        %v999 = vadd.f32 %v995, %v997
        %v1001 = vrot.slane %v999, 7
        %v1003 = vsel %vm465, 0.0, %v1001
        %v1004 = vsel %vm362, %v1003, 0.0
        %v1006 = vrot.slane %v1004, 1
        %v1008 = vadd.f32 %v1004, %v1006
        %v1009 = vrot.slane %v1004, 2
        %v1011 = vadd.f32 %v1008, %v1009
        %v1012 = vmul.f32 %v1011, 0.11111111
        %1014 = vrot.lane.b32.xlu0 %v1012, 1
        %v1015 = vpop.permute.xlu0 %1014
        %v1017 = vsel %vm572, 0.0, %v1015
        %v1018 = vsel %vm583, %v1017, 0.0
        %1020 = vrot.lane.b32.xlu0 %v1018, 127
        %v1021 = vpop.permute.xlu0 %1020
        %v1023 = vadd.f32 %v1018, %v1021
        %1024 = vrot.lane.b32.xlu0 %v1018, 126
        %v1025 = vpop.permute.xlu0 %1024
        %v1027 = vadd.f32 %v1023, %v1025
        %v1029 = vrot.slane %v1027, 7
        %v1031 = vsel %vm465, 0.0, %v1029
        %v1032 = vsel %vm362, %v1031, 0.0
        %v1034 = vrot.slane %v1032, 1
        %v1036 = vadd.f32 %v1032, %v1034
        %v1037 = vrot.slane %v1032, 2
        %v1039 = vadd.f32 %v1036, %v1037
        %v1040 = vmul.f32 %v1039, 0.11111111
        %1042 = vrot.lane.b32.xlu0 %v1040, 1
        %v1043 = vpop.permute.xlu0 %1042
        %v1045 = vsel %vm572, 0.0, %v1043
        %v1046 = vsel %vm583, %v1045, 0.0
        %1048 = vrot.lane.b32.xlu0 %v1046, 127
        %v1049 = vpop.permute.xlu0 %1048
        %v1051 = vadd.f32 %v1046, %v1049
        %1052 = vrot.lane.b32.xlu0 %v1046, 126
        %v1053 = vpop.permute.xlu0 %1052
        %v1055 = vadd.f32 %v1051, %v1053
        %v1057 = vrot.slane %v1055, 7
        %v1059 = vsel %vm465, 0.0, %v1057
        %v1060 = vsel %vm362, %v1059, 0.0
        %v1062 = vrot.slane %v1060, 1
        %v1064 = vadd.f32 %v1060, %v1062
        %v1065 = vrot.slane %v1060, 2
        %v1067 = vadd.f32 %v1064, %v1065
        %v1068 = vmul.f32 %v1067, 0.11111111
        %1070 = vrot.lane.b32.xlu0 %v1068, 1
        %v1071 = vpop.permute.xlu0 %1070
        %v1073 = vsel %vm572, 0.0, %v1071
        %v1074 = vsel %vm583, %v1073, 0.0
        %1076 = vrot.lane.b32.xlu0 %v1074, 127
        %v1077 = vpop.permute.xlu0 %1076
        %v1079 = vadd.f32 %v1074, %v1077
        %1080 = vrot.lane.b32.xlu0 %v1074, 126
        %v1081 = vpop.permute.xlu0 %1080
        %v1083 = vadd.f32 %v1079, %v1081
        %v1085 = vrot.slane %v1083, 7
        %v1087 = vsel %vm465, 0.0, %v1085
        %v1088 = vsel %vm362, %v1087, 0.0
        %v1090 = vrot.slane %v1088, 1
        %v1092 = vadd.f32 %v1088, %v1090
        %v1093 = vrot.slane %v1088, 2
        %v1095 = vadd.f32 %v1092, %v1093
        %v1096 = vmul.f32 %v1095, 0.11111111
        %1098 = vrot.lane.b32.xlu0 %v1096, 1
        %v1099 = vpop.permute.xlu0 %1098
        %v1101 = vsel %vm572, 0.0, %v1099
        %v1102 = vsel %vm583, %v1101, 0.0
        %1104 = vrot.lane.b32.xlu0 %v1102, 127
        %v1105 = vpop.permute.xlu0 %1104
        %v1107 = vadd.f32 %v1102, %v1105
        %1108 = vrot.lane.b32.xlu0 %v1102, 126
        %v1109 = vpop.permute.xlu0 %1108
        %v1111 = vadd.f32 %v1107, %v1109
        %v1113 = vrot.slane %v1111, 7
        %v1115 = vsel %vm465, 0.0, %v1113
        %v1116 = vsel %vm362, %v1115, 0.0
        %v1118 = vrot.slane %v1116, 1
        %v1120 = vadd.f32 %v1116, %v1118
        %v1121 = vrot.slane %v1116, 2
        %v1123 = vadd.f32 %v1120, %v1121
        %v1124 = vmul.f32 %v1123, 0.11111111
        %1126 = vrot.lane.b32.xlu0 %v1124, 1
        %v1127 = vpop.permute.xlu0 %1126
        %v1129 = vsel %vm572, 0.0, %v1127
        %v1130 = vsel %vm583, %v1129, 0.0
        %1132 = vrot.lane.b32.xlu0 %v1130, 127
        %v1133 = vpop.permute.xlu0 %1132
        %v1135 = vadd.f32 %v1130, %v1133
        %1136 = vrot.lane.b32.xlu0 %v1130, 126
        %v1137 = vpop.permute.xlu0 %1136
        %v1139 = vadd.f32 %v1135, %v1137
        %v1141 = vrot.slane %v1139, 7
        %v1143 = vsel %vm465, 0.0, %v1141
        %v1144 = vsel %vm362, %v1143, 0.0
        %v1146 = vrot.slane %v1144, 1
        %v1148 = vadd.f32 %v1144, %v1146
        %v1149 = vrot.slane %v1144, 2
        %v1151 = vadd.f32 %v1148, %v1149
        %v1152 = vmul.f32 %v1151, 0.11111111
        %1154 = vrot.lane.b32.xlu0 %v1152, 1
        %v1155 = vpop.permute.xlu0 %1154
        %v1157 = vsel %vm572, 0.0, %v1155
        %v1158 = vsel %vm583, %v1157, 0.0
        %1160 = vrot.lane.b32.xlu0 %v1158, 127
        %v1161 = vpop.permute.xlu0 %1160
        %v1163 = vadd.f32 %v1158, %v1161
        %1164 = vrot.lane.b32.xlu0 %v1158, 126
        %v1165 = vpop.permute.xlu0 %1164
        %v1167 = vadd.f32 %v1163, %v1165
        %v1169 = vrot.slane %v1167, 7
        %v1171 = vsel %vm465, 0.0, %v1169
        %v1172 = vsel %vm362, %v1171, 0.0
        %v1174 = vrot.slane %v1172, 1
        %v1176 = vadd.f32 %v1172, %v1174
        %v1177 = vrot.slane %v1172, 2
        %v1179 = vadd.f32 %v1176, %v1177
        %v1180 = vmul.f32 %v1179, 0.11111111
        %vm1181 = vcmask 27648
        %1182 = vst.msk [vmem:[%s164] sm:$0xf] %vm1181, %v1180
        %1184 = vrot.lane.b32.xlu0 %v1180, 1
        %v1185 = vpop.permute.xlu0 %1184
        %v1187 = vsel %vm572, 0.0, %v1185
        %v1188 = vsel %vm583, %v1187, 0.0
        %1190 = vrot.lane.b32.xlu0 %v1188, 127
        %v1191 = vpop.permute.xlu0 %1190
        %v1193 = vadd.f32 %v1188, %v1191
        %1194 = vrot.lane.b32.xlu0 %v1188, 126
        %v1195 = vpop.permute.xlu0 %1194
        %v1197 = vadd.f32 %v1193, %v1195
        %v1199 = vrot.slane %v1197, 7
        %v1201 = vsel %vm465, 0.0, %v1199
        %v1202 = vsel %vm362, %v1201, 0.0
        %v1204 = vrot.slane %v1202, 1
        %v1206 = vadd.f32 %v1202, %v1204
        %v1207 = vrot.slane %v1202, 2
        %v1209 = vadd.f32 %v1206, %v1207
        %v1211 = vrot.slane %v1209, 1
        %v1213 = vsel %vm465, %v1209, %v1211
        %1215 = vrot.lane.b32.xlu0 %v1213, 127
        %v1216 = vpop.permute.xlu0 %1215
        %v1218 = vsel %vm572, %v1213, %v1216
        %v1219 = vmul.f32 %v1218, 0.11111111
        %1221 = vrot.lane.b32.xlu0 %v1219, 1
        %v1222 = vpop.permute.xlu0 %1221
        %v1224 = vsel %vm572, 0.0, %v1222
        %v1225 = vsel %vm195, %v1224, 0.0
        %1227 = vrot.lane.b32.xlu0 %v1225, 127
        %v1228 = vpop.permute.xlu0 %1227
        %v1230 = vadd.f32 %v1225, %v1228
        %1231 = vrot.lane.b32.xlu0 %v1225, 126
        %v1232 = vpop.permute.xlu0 %1231
        %v1234 = vadd.f32 %v1230, %v1232
        %v1236 = vrot.slane %v1234, 7
        %v1238 = vsel %vm465, 0.0, %v1236
        %v1239 = vsel %vm309, %v1238, 0.0
        %v1241 = vrot.slane %v1239, 1
        %v1243 = vadd.f32 %v1239, %v1241
        %v1244 = vrot.slane %v1239, 2
        %v1246 = vadd.f32 %v1243, %v1244
        %v1247 = vmul.f32 %v1246, 0.11111111
        %1249 = vrot.lane.b32.xlu0 %v1247, 1
        %v1250 = vpop.permute.xlu0 %1249
        %v1252 = vsel %vm572, 0.0, %v1250
        %v1253 = vsel %vm195, %v1252, 0.0
        %1255 = vrot.lane.b32.xlu0 %v1253, 127
        %v1256 = vpop.permute.xlu0 %1255
        %v1258 = vadd.f32 %v1253, %v1256
        %1259 = vrot.lane.b32.xlu0 %v1253, 126
        %v1260 = vpop.permute.xlu0 %1259
        %v1262 = vadd.f32 %v1258, %v1260
        %v1264 = vrot.slane %v1262, 7
        %v1266 = vsel %vm465, 0.0, %v1264
        %v1267 = vsel %vm309, %v1266, 0.0
        %v1269 = vrot.slane %v1267, 1
        %v1271 = vadd.f32 %v1267, %v1269
        %v1272 = vrot.slane %v1267, 2
        %v1274 = vadd.f32 %v1271, %v1272
        %v1275 = vmul.f32 %v1274, 0.11111111
        %1277 = vrot.lane.b32.xlu0 %v1275, 1
        %v1278 = vpop.permute.xlu0 %1277
        %v1280 = vsel %vm572, 0.0, %v1278
        %v1281 = vsel %vm195, %v1280, 0.0
        %1283 = vrot.lane.b32.xlu0 %v1281, 127
        %v1284 = vpop.permute.xlu0 %1283
        %v1286 = vadd.f32 %v1281, %v1284
        %1287 = vrot.lane.b32.xlu0 %v1281, 126
        %v1288 = vpop.permute.xlu0 %1287
        %v1290 = vadd.f32 %v1286, %v1288
        %v1292 = vrot.slane %v1290, 7
        %v1294 = vsel %vm465, 0.0, %v1292
        %v1295 = vsel %vm309, %v1294, 0.0
        %v1297 = vrot.slane %v1295, 1
        %v1299 = vadd.f32 %v1295, %v1297
        %v1300 = vrot.slane %v1295, 2
        %v1302 = vadd.f32 %v1299, %v1300
        %v1303 = vmul.f32 %v1302, 0.11111111
        %1305 = vrot.lane.b32.xlu0 %v1303, 1
        %v1306 = vpop.permute.xlu0 %1305
        %v1308 = vsel %vm572, 0.0, %v1306
        %v1309 = vsel %vm195, %v1308, 0.0
        %1311 = vrot.lane.b32.xlu0 %v1309, 127
        %v1312 = vpop.permute.xlu0 %1311
        %v1314 = vadd.f32 %v1309, %v1312
        %1315 = vrot.lane.b32.xlu0 %v1309, 126
        %v1316 = vpop.permute.xlu0 %1315
        %v1318 = vadd.f32 %v1314, %v1316
        %v1320 = vrot.slane %v1318, 7
        %v1322 = vsel %vm465, 0.0, %v1320
        %v1323 = vsel %vm309, %v1322, 0.0
        %v1325 = vrot.slane %v1323, 1
        %v1327 = vadd.f32 %v1323, %v1325
        %v1328 = vrot.slane %v1323, 2
        %v1330 = vadd.f32 %v1327, %v1328
        %v1331 = vmul.f32 %v1330, 0.11111111
        %1333 = vrot.lane.b32.xlu0 %v1331, 1
        %v1334 = vpop.permute.xlu0 %1333
        %v1336 = vsel %vm572, 0.0, %v1334
        %v1337 = vsel %vm195, %v1336, 0.0
        %1339 = vrot.lane.b32.xlu0 %v1337, 127
        %v1340 = vpop.permute.xlu0 %1339
        %v1342 = vadd.f32 %v1337, %v1340
        %1343 = vrot.lane.b32.xlu0 %v1337, 126
        %v1344 = vpop.permute.xlu0 %1343
        %v1346 = vadd.f32 %v1342, %v1344
        %v1348 = vrot.slane %v1346, 7
        %v1350 = vsel %vm465, 0.0, %v1348
        %v1351 = vsel %vm309, %v1350, 0.0
        %v1353 = vrot.slane %v1351, 1
        %v1355 = vadd.f32 %v1351, %v1353
        %v1356 = vrot.slane %v1351, 2
        %v1358 = vadd.f32 %v1355, %v1356
        %v1359 = vmul.f32 %v1358, 0.11111111
        %1361 = vrot.lane.b32.xlu0 %v1359, 1
        %v1362 = vpop.permute.xlu0 %1361
        %v1364 = vsel %vm572, 0.0, %v1362
        %v1365 = vsel %vm195, %v1364, 0.0
        %1367 = vrot.lane.b32.xlu0 %v1365, 127
        %v1368 = vpop.permute.xlu0 %1367
        %v1370 = vadd.f32 %v1365, %v1368
        %1371 = vrot.lane.b32.xlu0 %v1365, 126
        %v1372 = vpop.permute.xlu0 %1371
        %v1374 = vadd.f32 %v1370, %v1372
        %v1376 = vrot.slane %v1374, 7
        %v1378 = vsel %vm465, 0.0, %v1376
        %v1379 = vsel %vm309, %v1378, 0.0
        %v1381 = vrot.slane %v1379, 1
        %v1383 = vadd.f32 %v1379, %v1381
        %v1384 = vrot.slane %v1379, 2
        %v1386 = vadd.f32 %v1383, %v1384
        %v1387 = vmul.f32 %v1386, 0.11111111
        %1389 = vrot.lane.b32.xlu0 %v1387, 1
        %v1390 = vpop.permute.xlu0 %1389
        %v1392 = vsel %vm572, 0.0, %v1390
        %v1393 = vsel %vm195, %v1392, 0.0
        %1395 = vrot.lane.b32.xlu0 %v1393, 127
        %v1396 = vpop.permute.xlu0 %1395
        %v1398 = vadd.f32 %v1393, %v1396
        %1399 = vrot.lane.b32.xlu0 %v1393, 126
        %v1400 = vpop.permute.xlu0 %1399
        %v1402 = vadd.f32 %v1398, %v1400
        %v1404 = vrot.slane %v1402, 7
        %v1406 = vsel %vm465, 0.0, %v1404
        %v1407 = vsel %vm309, %v1406, 0.0
        %v1409 = vrot.slane %v1407, 1
        %v1411 = vadd.f32 %v1407, %v1409
        %v1412 = vrot.slane %v1407, 2
        %v1414 = vadd.f32 %v1411, %v1412
        %v1415 = vmul.f32 %v1414, 0.11111111
        %1417 = vrot.lane.b32.xlu0 %v1415, 1
        %v1418 = vpop.permute.xlu0 %1417
        %v1420 = vsel %vm572, 0.0, %v1418
        %v1421 = vsel %vm195, %v1420, 0.0
        %1423 = vrot.lane.b32.xlu0 %v1421, 127
        %v1424 = vpop.permute.xlu0 %1423
        %v1426 = vadd.f32 %v1421, %v1424
        %1427 = vrot.lane.b32.xlu0 %v1421, 126
        %v1428 = vpop.permute.xlu0 %1427
        %v1430 = vadd.f32 %v1426, %v1428
        %v1432 = vrot.slane %v1430, 7
        %v1434 = vsel %vm465, 0.0, %v1432
        %v1435 = vsel %vm309, %v1434, 0.0
        %v1437 = vrot.slane %v1435, 1
        %v1439 = vadd.f32 %v1435, %v1437
        %v1440 = vrot.slane %v1435, 2
        %v1442 = vadd.f32 %v1439, %v1440
        %v1443 = vmul.f32 %v1442, 0.11111111
        %1445 = vrot.lane.b32.xlu0 %v1443, 1
        %v1446 = vpop.permute.xlu0 %1445
        %v1448 = vsel %vm572, 0.0, %v1446
        %v1449 = vsel %vm195, %v1448, 0.0
        %1451 = vrot.lane.b32.xlu0 %v1449, 127
        %v1452 = vpop.permute.xlu0 %1451
        %v1454 = vadd.f32 %v1449, %v1452
        %1455 = vrot.lane.b32.xlu0 %v1449, 126
        %v1456 = vpop.permute.xlu0 %1455
        %v1458 = vadd.f32 %v1454, %v1456
        %v1460 = vrot.slane %v1458, 7
        %v1462 = vsel %vm465, 0.0, %v1460
        %v1463 = vsel %vm309, %v1462, 0.0
        %v1465 = vrot.slane %v1463, 1
        %v1467 = vadd.f32 %v1463, %v1465
        %v1468 = vrot.slane %v1463, 2
        %v1470 = vadd.f32 %v1467, %v1468
        %v1471 = vmul.f32 %v1470, 0.11111111
        %1473 = vrot.lane.b32.xlu0 %v1471, 1
        %v1474 = vpop.permute.xlu0 %1473
        %v1476 = vsel %vm572, 0.0, %v1474
        %v1477 = vsel %vm195, %v1476, 0.0
        %1479 = vrot.lane.b32.xlu0 %v1477, 127
        %v1480 = vpop.permute.xlu0 %1479
        %v1482 = vadd.f32 %v1477, %v1480
        %1483 = vrot.lane.b32.xlu0 %v1477, 126
        %v1484 = vpop.permute.xlu0 %1483
        %v1486 = vadd.f32 %v1482, %v1484
        %v1488 = vrot.slane %v1486, 7
        %v1490 = vsel %vm465, 0.0, %v1488
        %v1491 = vsel %vm309, %v1490, 0.0
        %v1493 = vrot.slane %v1491, 1
        %v1495 = vadd.f32 %v1491, %v1493
        %v1496 = vrot.slane %v1491, 2
        %v1498 = vadd.f32 %v1495, %v1496
        %v1499 = vmul.f32 %v1498, 0.11111111
        %1501 = vrot.lane.b32.xlu0 %v1499, 1
        %v1502 = vpop.permute.xlu0 %1501
        %v1504 = vsel %vm572, 0.0, %v1502
        %v1505 = vsel %vm195, %v1504, 0.0
        %1507 = vrot.lane.b32.xlu0 %v1505, 127
        %v1508 = vpop.permute.xlu0 %1507
        %v1510 = vadd.f32 %v1505, %v1508
        %1511 = vrot.lane.b32.xlu0 %v1505, 126
        %v1512 = vpop.permute.xlu0 %1511
        %v1514 = vadd.f32 %v1510, %v1512
        %v1516 = vrot.slane %v1514, 7
        %v1518 = vsel %vm465, 0.0, %v1516
        %v1519 = vsel %vm309, %v1518, 0.0
        %v1521 = vrot.slane %v1519, 1
        %v1523 = vadd.f32 %v1519, %v1521
        %v1524 = vrot.slane %v1519, 2
        %v1526 = vadd.f32 %v1523, %v1524
        %v1527 = vmul.f32 %v1526, 0.11111111
        %vm1528 = vcmask 9216
        %1529 = vst.msk [vmem:[%s174] sm:$0x3] %vm1528, %v1527
        %s1530 = sand.u32 %s54, 1
        %s1531 = scalar_lea.sflag [#allocation4], %s1530
        %s1532 = sand.u32 %s54, 1
        %s1533 = smul.addr %s1532, 4
        %s1534 = scalar_lea.vmem [#allocation5], %s1533
        %p1535 = scmp.lt.s32.totalorder %s20, 5
        %s1536 = scalar_select %p1535, %s20, 5
        %s1537 = smul.addr %s1536, 2
        %s1538 = scalar_lea.vmem %s2, %s1537
        // Predicated region
        $region29: #{colornet_rgb_forward.1} parent=23 // pred_check
          %p1539 = pneg %p64
        $region30: #{colornet_rgb_forward.1} parent=23 // pred_check_branch
          %1541 = sbr.rel (%p1539) target = $region32
        $region31: #{colornet_rgb_forward.1} parent=23 // pred_region
          %1543 = vsyncadd %s1531, 0
          %s1544 = smul.addr %s20, 4
          %s1545 = scalar_lea.hbm %s1, %s1544
          %s1547 = sshll.u32 %s1534, 4
          %s1548 = int_to_ptr.vmem [resolvable:$true] %s1547
          %s1549 = sshll.u32 %s1545, 4
          %s1550 = int_to_ptr.hbm [resolvable:$true] %s1549
          %1552 = dma.vmem_to_hbm [thread:$0]  %s1548, 64, %s1550, %s1531
        $region32: #{colornet_rgb_forward.1} parent=23 // pred_fallthru
          _
        // Predicated region
        $region33: #{colornet_rgb_forward.1} parent=23 // pred_check
          %p1553 = pneg %p90
        $region34: #{colornet_rgb_forward.1} parent=23 // pred_check_branch
          %1555 = sbr.rel (%p1553) target = $region36
        $region35: #{colornet_rgb_forward.1} parent=23 // pred_region
          _
        $region36: #{colornet_rgb_forward.1} parent=23 // pred_fallthru
          _
      $region24: #{colornet_rgb_forward.1} parent=5 // pred_fallthru
        _
      %p1556 = scmp.le.s32.totalorder 2, %s15
      // Predicated region
      $region37: #{colornet_rgb_forward.1} parent=5 // pred_check
        %p1557 = pneg %p1556
      $region38: #{colornet_rgb_forward.1} parent=5 // pred_check_branch
        %1559 = sbr.rel (%p1557) target = $region40
      $region39: #{colornet_rgb_forward.1} parent=5 // pred_region
        %s1560 = ssub.s32 %s15, 2
        // Predicated region
        $region41: #{colornet_rgb_forward.1} parent=39 // pred_check
          %p1561 = pneg %p70
        $region42: #{colornet_rgb_forward.1} parent=39 // pred_check_branch
          %1563 = sbr.rel (%p1561) target = $region44
        $region43: #{colornet_rgb_forward.1} parent=39 // pred_region
          %s1564 = sand.u32 %s55, 1
          %s1565 = scalar_lea.sflag [#allocation4], %s1564
          %s1566 = sand.u32 %s55, 1
          %s1567 = smul.addr %s1566, 4
          %s1568 = scalar_lea.vmem [#allocation5], %s1567
          %1570 = dma.done %s1565, 64
        $region44: #{colornet_rgb_forward.1} parent=39 // pred_fallthru
          _
        // Predicated region
        $region45: #{colornet_rgb_forward.1} parent=39 // pred_check
          %p1571 = pneg %p96
        $region46: #{colornet_rgb_forward.1} parent=39 // pred_check_branch
          %1573 = sbr.rel (%p1571) target = $region48
        $region47: #{colornet_rgb_forward.1} parent=39 // pred_region
          %p1574 = scmp.lt.s32.totalorder %s21, 5
          %s1575 = scalar_select %p1574, %s21, 5
          %s1576 = smul.addr %s1575, 2
          %s1577 = scalar_lea.vmem %s2, %s1576
        $region48: #{colornet_rgb_forward.1} parent=39 // pred_fallthru
          _
      $region40: #{colornet_rgb_forward.1} parent=5 // pred_fallthru
        _
    $region6: #{colornet_rgb_forward.1} parent=1 // loop_footer
      %s19 = sadd.s32 1, %s15
    $region7: #{colornet_rgb_forward.1} parent=1 // loop_footer_branch
      %14 = sbr.rel target = $region3
    $region8: #{colornet_rgb_forward.1} parent=1 // loop_exit
      _
    %1578 = vsyncpa [#allocation3], 1
    %s1579 = scalar_lea.sflag [#allocation3], 1
    %1580 = vsyncpa %s1579, 1
    %1581 = vsyncpa [#allocation4], 1
    %s1582 = scalar_lea.sflag [#allocation4], 1
    %1583 = vsyncpa %s1582, 1

</llo_original>
